<compile_context>
chip_gen: v6e
topology: v6e:2x2x1
jax: 0.10.0
libtpu: 0.0.40
codegen_flags: <defaults>
</compile_context>

<pallas_src>
import functools

import jax
import jax.numpy as jnp
from jax.experimental import pallas as pl
from jax.experimental.pallas import tpu as pltpu


# ---------------------------------------------------------------------------
# small helpers
# ---------------------------------------------------------------------------
def _round_up(a, m):
    return ((a + m - 1) // m) * m


def _round_down(a, m):
    return max(m, (a // m) * m)


def _softplus(x):
    # PyTorch nn.Softplus (beta=1, threshold=20)
    return jnp.where(x > 20.0, x, jnp.log1p(jnp.exp(jnp.minimum(x, 20.0))))


def _ln_relu(h):
    # LayerNorm(elementwise_affine=False, eps=1e-5) -> ReLU.
    # Centered (shifted) variance: safer than E[x^2]-E[x]^2 against cancellation.
    d = h.shape[-1]
    mean = jnp.sum(h, axis=-1, keepdims=True) * (1.0 / d)
    c = h - mean
    var = jnp.sum(c * c, axis=-1, keepdims=True) * (1.0 / d)
    return jnp.maximum(c * jax.lax.rsqrt(var + 1e-5), 0.0)


# ---------------------------------------------------------------------------
# kernel bodies
# ---------------------------------------------------------------------------
def _make_backbone_kernel(n_enc_seq, n_dec_seq, xz_dim, compute_dtype):
    cdt = compute_dtype

    def mm(a, w):
        # MXU matmul in compute dtype (bf16 by default), f32 accumulation.
        return jnp.dot(a.astype(cdt), w.astype(cdt), preferred_element_type=jnp.float32)

    def kernel(x_ref, b_ref, eps_ref, *refs):
        it = iter(refs)
        enc0_wx, enc0_wb, enc0_b = next(it), next(it), next(it)
        enc_seq = [(next(it), next(it)) for _ in range(n_enc_seq)]
        mulv_w, mulv_b = next(it), next(it)
        dec0_wz, dec0_wb, dec0_b = next(it), next(it), next(it)
        dec_seq = [(next(it), next(it)) for _ in range(n_dec_seq)]
        zms_ref, hdec_ref = next(it), next(it)

        xb = x_ref[...]
        bb = b_ref[...]

        # Encoder: (x||b) @ W == x@Wx + b@Wb  (concat folded into split weights)
        h = _ln_relu(mm(xb, enc0_wx[...]) + mm(bb, enc0_wb[...]) + enc0_b[...])
        for (w, bi) in enc_seq:
            h = _ln_relu(mm(h, w[...]) + bi[...])

        # Fused mu/logvar head: one wide MXU push instead of two narrow ones.
        mulv = mm(h, mulv_w[...]) + mulv_b[...]
        mu = mulv[:, :xz_dim]
        logvar = mulv[:, xz_dim:]
        scale = _softplus(logvar)

        # qz = Normal(mu, softplus(logvar)); z = qz.rsample() = mu + scale * eps
        # TODO(synk): draw eps in-kernel via pltpu.prng_seed/prng_random_bits instead of
        #             streaming a precomputed eps array from HBM.
        z = mu + scale * eps_ref[...]

        # Lane-packed [z | mu | scale] output -> one dense store instead of three narrow ones.
        zms_ref[...] = jnp.concatenate([z, mu, scale], axis=-1)

        # Decoder hidden path: (z||b) @ W == z@Wz + b@Wb
        hd = _ln_relu(mm(z, dec0_wz[...]) + mm(bb, dec0_wb[...]) + dec0_b[...])
        for (w, bi) in dec_seq:
            hd = _ln_relu(mm(hd, w[...]) + bi[...])
        hdec_ref[...] = hd.astype(hdec_ref.dtype)   # cached for the head call (bf16)

    return kernel


def _make_head_kernel(compute_dtype):
    cdt = compute_dtype

    def kernel(hdec_ref, ldw_ref, ldb_ref, xld_ref):
        ld = jnp.dot(hdec_ref[...].astype(cdt), ldw_ref[...].astype(cdt),
                     preferred_element_type=jnp.float32) + ldb_ref[...]
        xld_ref[...] = _softplus(ld).astype(xld_ref.dtype)

    return kernel


# ---------------------------------------------------------------------------
# wrapper:  (x, xnorm_mat, b, eps) -> (z, (mu, scale), xld)
# ---------------------------------------------------------------------------
def scvae_batch_forward(params, x, xnorm_mat, b, eps, *, tm=None, tn=None,
                        compute_dtype=jnp.bfloat16, xld_dtype=jnp.float32):
    del xnorm_mat                                   # unused in the PyTorch forward
    N, x_dim = x.shape
    batch_num = b.shape[-1]
    mu_w, mu_b = params["enc_h2mu"]
    lv_w, lv_b = params["enc_h2logvar"]
    xz_dim = mu_w.shape[1]
    ld_w, ld_b = params["dec_h2ld"]
    dec_h = ld_w.shape[0]

    isz = lambda a: jnp.dtype(a.dtype).itemsize

    # ---- generation-aware VMEM budget (64 MiB on v7x, 128 MiB on v5e/v6e) -------------
    try:
        vmem_cap = int(pltpu.get_tpu_info().vmem_capacity_bytes)
    except Exception:
        vmem_cap = 64 << 20                          # conservative fallback
    vmem_budget = max(32 << 20, vmem_cap - (8 << 20))

    # ---- batch tile: multiple of 8 (16 preferred for bf16), >=2 tiles when N allows ----
    # (keeps both v7x TensorCores busy on the 'parallel' axis), capped so the
    # double-buffered x input block stays well inside VMEM for 10k-36k gene inputs.
    if tm is None:
        if N <= 16:
            tm = _round_up(N, 8)
        elif N <= 512:
            tm = _round_up(pl.cdiv(N, 2), 16)        # nb >= 2 -> megacore work on v7x
        else:
            tm = 256
        x_row_bytes = x_dim * isz(x)
        max_tm_x = (vmem_budget // 3) // max(1, 2 * x_row_bytes)
        if max_tm_x < tm:
            tm = _round_down(int(max_tm_x), 8)
    tm = int(tm)
    tm = max(8, min(_round_up(tm, 8), _round_up(N, 8)))
    nb = pl.cdiv(N, tm)

    # ---- gene tile for the streamed decoder head: multiple of 128, sized to VMEM -------
    if tn is None:
        target = 2048 if vmem_budget >= (96 << 20) else (
            1024 if vmem_budget >= (48 << 20) else 512)
        per_tn = 2 * (dec_h * isz(ld_w) + tm * jnp.dtype(xld_dtype).itemsize) + 8
        max_tn = _round_down(int((vmem_budget // 2) // per_tn), 128)
        tn = max(128, min(target, max_tn))
    tn = int(min(_round_up(int(tn), 128), _round_up(x_dim, 128)))
    ng = pl.cdiv(x_dim, tn)

    # ---- zero-pad ragged edges (rows for batch, gene columns for the head weight) ------
    N_pad = nb * tm
    x_dim_pad = ng * tn
    if N_pad != N:
        padr = N_pad - N
        x = jnp.pad(x, ((0, padr), (0, 0)))
        b = jnp.pad(b, ((0, padr), (0, 0)))
        eps = jnp.pad(eps, ((0, padr), (0, 0)))
    if x_dim_pad != x_dim:
        padc = x_dim_pad - x_dim
        ld_w = jnp.pad(ld_w, ((0, 0), (0, padc)))    # padded cols produce softplus(0); sliced off
        ld_b = jnp.pad(ld_b, ((0, 0), (0, padc)))

    # ---- fuse mu / logvar heads into one matmul ----------------------------------------
    mulv_w = jnp.concatenate([mu_w, lv_w], axis=1)
    mulv_b = jnp.concatenate([mu_b, lv_b], axis=1)

    enc0_wx, enc0_wb, enc0_b = params["enc_in"]
    dec0_wz, dec0_wb, dec0_b = params["dec_in"]
    resident = [enc0_wx, enc0_wb, enc0_b]
    for (w, bi) in params["enc_seq"]:
        resident += [w, bi]
    resident += [mulv_w, mulv_b, dec0_wz, dec0_wb, dec0_b]
    for (w, bi) in params["dec_seq"]:
        resident += [w, bi]

    # ============================ call 1: backbone =======================================
    def _resident_spec(a):
        nd = a.ndim
        return pl.BlockSpec(a.shape, lambda i, _nd=nd: (0,) * _nd)

    bb_in_specs = [
        pl.BlockSpec((tm, x_dim), lambda i: (i, 0)),
        pl.BlockSpec((tm, batch_num), lambda i: (i, 0)),
        pl.BlockSpec((tm, xz_dim), lambda i: (i, 0)),
    ] + [_resident_spec(a) for a in resident]

    bb_out_shape = (
        jax.ShapeDtypeStruct((N_pad, 3 * xz_dim), jnp.float32),     # packed [z | mu | scale]
        jax.ShapeDtypeStruct((N_pad, dec_h), compute_dtype),        # cached decoder hidden
    )
    bb_out_specs = (
        pl.BlockSpec((tm, 3 * xz_dim), lambda i: (i, 0)),
        pl.BlockSpec((tm, dec_h), lambda i: (i, 0)),
    )

    resident_bytes = sum(a.size * isz(a) for a in resident)
    bb_io = tm * (x_dim * isz(x) + batch_num * isz(b) + xz_dim * isz(eps))
    bb_io += tm * (3 * xz_dim * 4 + dec_h * jnp.dtype(compute_dtype).itemsize)
    bb_vmem = int(min(vmem_budget, max(32 << 20, 2 * resident_bytes + 2 * bb_io + (4 << 20))))

    zms, hdec = pl.pallas_call(
        _make_backbone_kernel(len(params["enc_seq"]), len(params["dec_seq"]),
                              xz_dim, compute_dtype),
        out_shape=bb_out_shape,
        grid_spec=pltpu.PrefetchScalarGridSpec(
            num_scalar_prefetch=0,
            grid=(nb,),
            in_specs=bb_in_specs,
            out_specs=bb_out_specs,
        ),
        compiler_params=pltpu.CompilerParams(
            dimension_semantics=("parallel",),
            vmem_limit_bytes=bb_vmem,
        ),
    )(x, b, eps, *resident)

    # ============================ call 2: decoder head ===================================
    # Gene axis OUTER -> the ld_w block index only depends on the outer axis, so each
    # (dec_h, tn) weight block is DMA'd exactly once; the small bf16 hidden is re-streamed.
    head_in_specs = [
        pl.BlockSpec((tm, dec_h), lambda g, i: (i, 0)),     # cached decoder hidden
        pl.BlockSpec((dec_h, tn), lambda g, i: (0, g)),     # final-layer weight, gene-tiled
        pl.BlockSpec((1, tn), lambda g, i: (0, g)),         # final-layer bias,   gene-tiled
    ]
    head_out_spec = pl.BlockSpec((tm, tn), lambda g, i: (i, g))

    head_io = 2 * (tm * dec_h * jnp.dtype(compute_dtype).itemsize
                   + dec_h * tn * isz(ld_w) + tn * isz(ld_b)
                   + tm * tn * jnp.dtype(xld_dtype).itemsize)
    head_vmem = int(min(vmem_budget, max(32 << 20, head_io + (4 << 20))))

    xld = pl.pallas_call(
        _make_head_kernel(compute_dtype),
        out_shape=jax.ShapeDtypeStruct((N_pad, x_dim_pad), xld_dtype),
        grid_spec=pltpu.PrefetchScalarGridSpec(
            num_scalar_prefetch=0,
            grid=(ng, nb),
            in_specs=head_in_specs,
            out_specs=head_out_spec,
        ),
        compiler_params=pltpu.CompilerParams(
            dimension_semantics=("parallel", "parallel"),   # both axes shardable (v7x megacore)
            vmem_limit_bytes=head_vmem,
        ),
    )(hdec, ld_w, ld_b)

    z = zms[:N, :xz_dim]
    qz_mu = zms[:N, xz_dim:2 * xz_dim]
    qz_scale = zms[:N, 2 * xz_dim:]
    xld = xld[:N, :x_dim]
    return z, (qz_mu, qz_scale), xld


# ---------------------------------------------------------------------------
# Parameter construction (deterministic, PyTorch-Linear-style uniform init).
# Matmul weights are stored in the MXU compute dtype (bf16) to halve weight DMA.
# ---------------------------------------------------------------------------
def _init_linear(key, in_dim, out_dim, w_dtype):
    kw, kb = jax.random.split(key)
    bound = in_dim ** -0.5
    w = jax.random.uniform(kw, (in_dim, out_dim), jnp.float32, -bound, bound)
    bias = jax.random.uniform(kb, (1, out_dim), jnp.float32, -bound, bound)
    return w.astype(w_dtype), bias


def _init_split_linear(key, in_a, in_b, out_dim, w_dtype):
    # One conceptual Linear(in_a + in_b, out) split row-wise so the kernel computes
    # x@Wx + b@Wb without materializing concat([x, b]).
    kw, kb = jax.random.split(key)
    fan_in = in_a + in_b
    bound = fan_in ** -0.5
    w = jax.random.uniform(kw, (fan_in, out_dim), jnp.float32, -bound, bound)
    bias = jax.random.uniform(kb, (1, out_dim), jnp.float32, -bound, bound)
    return w[:in_a].astype(w_dtype), w[in_a:].astype(w_dtype), bias


def init_params(key, x_dim, xz_dim, enc_h, dec_h, num_enc, num_dec, batch_num,
                weight_dtype=jnp.bfloat16):
    keys = iter(jax.random.split(key, 4 + 2 * (num_enc + num_dec)))
    p = {}
    # Encoder(num_enc, x_dim + batch_num, enc_h, xz_dim)
    p["enc_in"] = _init_split_linear(next(keys), x_dim, batch_num, enc_h, weight_dtype)
    p["enc_seq"] = [_init_linear(next(keys), enc_h, enc_h, weight_dtype)
                    for _ in range(num_enc - 1)]
    p["enc_h2mu"] = _init_linear(next(keys), enc_h, xz_dim, weight_dtype)
    p["enc_h2logvar"] = _init_linear(next(keys), enc_h, xz_dim, weight_dtype)
    # Decoder(num_dec, xz_dim + batch_num, dec_h, x_dim)
    p["dec_in"] = _init_split_linear(next(keys), xz_dim, batch_num, dec_h, weight_dtype)
    p["dec_seq"] = [_init_linear(next(keys), dec_h, dec_h, weight_dtype)
                    for _ in range(num_dec - 1)]
    p["dec_h2ld"] = _init_linear(next(keys), dec_h, x_dim, weight_dtype)
    return p


if __name__ == "__main__":
    # Small shapes consistent with the module, big enough to exercise both kernels'
    # grids (2 batch tiles; 2 gene tiles x 2 batch tiles on the head).
    N, x_dim, batch_num, xz_dim = 16, 256, 4, 8
    enc_h, dec_h = 32, 32
    num_enc_layers, num_dec_layers = 2, 2

    root = jax.random.PRNGKey(0)
    kp, kx, ke = jax.random.split(root, 3)

    params = init_params(kp, x_dim, xz_dim, enc_h, dec_h,
                         num_enc_layers, num_dec_layers, batch_num)

    x = jax.random.uniform(kx, (N, x_dim), jnp.float32)          # expression-like input
    xnorm_mat = jnp.ones((N, x_dim), jnp.float32)                # unused in forward
    b = jax.nn.one_hot(jnp.arange(N) % batch_num, batch_num, dtype=jnp.float32)
    eps = jax.random.normal(ke, (N, xz_dim), jnp.float32)        # rsample noise

    fwd = jax.jit(functools.partial(scvae_batch_forward, tm=8, tn=128))
    z, (qz_mu, qz_scale), xld = fwd(params, x, xnorm_mat, b, eps)
    jax.block_until_ready((z, qz_mu, qz_scale, xld))

    assert z.shape == (N, xz_dim)
    assert qz_mu.shape == (N, xz_dim) and qz_scale.shape == (N, xz_dim)
    assert xld.shape == (N, x_dim)
    assert bool(jnp.all(qz_scale > 0.0))
    assert bool(jnp.all(xld >= 0.0)) and bool(jnp.all(jnp.isfinite(xld)))
    assert bool(jnp.all(jnp.isfinite(z)))
    print("KERNEL_OK")
</pallas_src>

<mosaic_0001>
module attributes {stable_mosaic.version = 11 : i64} {
  func.func @kernel(%arg0: i32, %arg1: i32, %arg2: memref<8x32xbf16, #tpu.memory_space<vmem>>, %arg3: memref<32x128xbf16, #tpu.memory_space<vmem>>, %arg4: memref<1x128xf32, #tpu.memory_space<vmem>>, %arg5: memref<8x128xf32, #tpu.memory_space<vmem>>) attributes {dimension_semantics = [#tpu.dimension_semantics<parallel>, #tpu.dimension_semantics<parallel>], iteration_bounds = array<i64: 2, 2>, scalar_prefetch = 0 : i64, scratch_operands = 0 : i64, tpu.core_type = #tpu.core_type<tc>, window_params = [{transform_indices = @transform_0, window_bounds = array<i64: 8, 32>}, {transform_indices = @transform_1, window_bounds = array<i64: 32, 128>}, {transform_indices = @transform_2, window_bounds = array<i64: 1, 128>}, {transform_indices = @transform_3, window_bounds = array<i64: 8, 128>}]} {
    %c0 = arith.constant 0 : index
    %c0_0 = arith.constant 0 : index
    %0 = vector.load %arg2[%c0, %c0_0] : memref<8x32xbf16, #tpu.memory_space<vmem>>, vector<8x32xbf16>
    %c0_1 = arith.constant 0 : index
    %c0_2 = arith.constant 0 : index
    %1 = vector.load %arg3[%c0_1, %c0_2] : memref<32x128xbf16, #tpu.memory_space<vmem>>, vector<32x128xbf16>
    %cst = arith.constant dense<0.000000e+00> : vector<8x128xf32>
    %2 = tpu.matmul %0, %1, %cst {dimension_numbers = #tpu.dot_dimension_numbers<[1], [0], [0], [1], [0, 0, 1, 1], [], []>} : vector<8x32xbf16>, vector<32x128xbf16>, vector<8x128xf32> -> vector<8x128xf32>
    %c0_3 = arith.constant 0 : index
    %c0_4 = arith.constant 0 : index
    %3 = vector.load %arg4[%c0_3, %c0_4] : memref<1x128xf32, #tpu.memory_space<vmem>>, vector<1x128xf32>
    %4 = vector.broadcast %3 : vector<1x128xf32> to vector<8x128xf32>
    %5 = arith.addf %2, %4 : vector<8x128xf32>
    %cst_5 = arith.constant 2.000000e+01 : f32
    %6 = vector.broadcast %cst_5 : f32 to vector<8x128xf32>
    %7 = arith.cmpf ogt, %5, %6 : vector<8x128xf32>
    %cst_6 = arith.constant 2.000000e+01 : f32
    %8 = vector.broadcast %cst_6 : f32 to vector<8x128xf32>
    %9 = arith.minimumf %5, %8 : vector<8x128xf32>
    %10 = math.exp %9 : vector<8x128xf32>
    %11 = math.log1p %10 : vector<8x128xf32>
    %12 = arith.select %7, %5, %11 : vector<8x128xi1>, vector<8x128xf32>
    %c0_7 = arith.constant 0 : index
    %c0_8 = arith.constant 0 : index
    %13 = vector.load %arg5[%c0_7, %c0_8] : memref<8x128xf32, #tpu.memory_space<vmem>>, vector<8x128xf32>
    tpu.vector_store %arg5[%c0_7, %c0_8], %12 {strides = array<i32>} : memref<8x128xf32, #tpu.memory_space<vmem>>, vector<8x128xf32>,
    return
  }
  func.func @transform_0(%arg0: i32, %arg1: i32) -> (i32, i32) {
    %c0_i32 = arith.constant 0 : i32
    %c0_i32_0 = arith.constant 0 : i32
    return %arg1, %c0_i32 : i32, i32
  }
  func.func @transform_1(%arg0: i32, %arg1: i32) -> (i32, i32) {
    %c0_i32 = arith.constant 0 : i32
    %c0_i32_0 = arith.constant 0 : i32
    return %c0_i32, %arg0 : i32, i32
  }
  func.func @transform_2(%arg0: i32, %arg1: i32) -> (i32, i32) {
    %c0_i32 = arith.constant 0 : i32
    %c0_i32_0 = arith.constant 0 : i32
    return %c0_i32, %arg0 : i32, i32
  }
  func.func @transform_3(%arg0: i32, %arg1: i32) -> (i32, i32) {
    %c0_i32 = arith.constant 0 : i32
    return %arg1, %arg0 : i32, i32
  }
}

module attributes {stable_mosaic.version = 11 : i64} {
  func.func @kernel(%arg0: i32, %arg1: memref<8x256xf32, #tpu.memory_space<vmem>>, %arg2: memref<8x4xf32, #tpu.memory_space<vmem>>, %arg3: memref<8x8xf32, #tpu.memory_space<vmem>>, %arg4: memref<256x32xbf16, #tpu.memory_space<vmem>>, %arg5: memref<4x32xbf16, #tpu.memory_space<vmem>>, %arg6: memref<1x32xf32, #tpu.memory_space<vmem>>, %arg7: memref<32x32xbf16, #tpu.memory_space<vmem>>, %arg8: memref<1x32xf32, #tpu.memory_space<vmem>>, %arg9: memref<32x16xbf16, #tpu.memory_space<vmem>>, %arg10: memref<1x16xf32, #tpu.memory_space<vmem>>, %arg11: memref<8x32xbf16, #tpu.memory_space<vmem>>, %arg12: memref<4x32xbf16, #tpu.memory_space<vmem>>, %arg13: memref<1x32xf32, #tpu.memory_space<vmem>>, %arg14: memref<32x32xbf16, #tpu.memory_space<vmem>>, %arg15: memref<1x32xf32, #tpu.memory_space<vmem>>, %arg16: memref<8x24xf32, #tpu.memory_space<vmem>>, %arg17: memref<8x32xbf16, #tpu.memory_space<vmem>>) attributes {dimension_semantics = [#tpu.dimension_semantics<parallel>], iteration_bounds = array<i64: 2>, scalar_prefetch = 0 : i64, scratch_operands = 0 : i64, tpu.core_type = #tpu.core_type<tc>, window_params = [{transform_indices = @transform_0, window_bounds = array<i64: 8, 256>}, {transform_indices = @transform_1, window_bounds = array<i64: 8, 4>}, {transform_indices = @transform_2, window_bounds = array<i64: 8, 8>}, {pipeline_mode = #tpu.pipeline_mode<synchronous>, transform_indices = @transform_3, window_bounds = array<i64: 256, 32>}, {pipeline_mode = #tpu.pipeline_mode<synchronous>, transform_indices = @transform_4, window_bounds = array<i64: 4, 32>}, {pipeline_mode = #tpu.pipeline_mode<synchronous>, transform_indices = @transform_5, window_bounds = array<i64: 1, 32>}, {pipeline_mode = #tpu.pipeline_mode<synchronous>, transform_indices = @transform_6, window_bounds = array<i64: 32, 32>}, {pipeline_mode = #tpu.pipeline_mode<synchronous>, transform_indices = @transform_7, window_bounds = array<i64: 1, 32>}, {pipeline_mode = #tpu.pipeline_mode<synchronous>, transform_indices = @transform_8, window_bounds = array<i64: 32, 16>}, {pipeline_mode = #tpu.pipeline_mode<synchronous>, transform_indices = @transform_9, window_bounds = array<i64: 1, 16>}, {pipeline_mode = #tpu.pipeline_mode<synchronous>, transform_indices = @transform_10, window_bounds = array<i64: 8, 32>}, {pipeline_mode = #tpu.pipeline_mode<synchronous>, transform_indices = @transform_11, window_bounds = array<i64: 4, 32>}, {pipeline_mode = #tpu.pipeline_mode<synchronous>, transform_indices = @transform_12, window_bounds = array<i64: 1, 32>}, {pipeline_mode = #tpu.pipeline_mode<synchronous>, transform_indices = @transform_13, window_bounds = array<i64: 32, 32>}, {pipeline_mode = #tpu.pipeline_mode<synchronous>, transform_indices = @transform_14, window_bounds = array<i64: 1, 32>}, {transform_indices = @transform_15, window_bounds = array<i64: 8, 24>}, {transform_indices = @transform_16, window_bounds = array<i64: 8, 32>}]} {
    %c0 = arith.constant 0 : index
    %c0_0 = arith.constant 0 : index
    %0 = vector.load %arg1[%c0, %c0_0] : memref<8x256xf32, #tpu.memory_space<vmem>>, vector<8x256xf32>
    %c0_1 = arith.constant 0 : index
    %c0_2 = arith.constant 0 : index
    %1 = vector.load %arg2[%c0_1, %c0_2] : memref<8x4xf32, #tpu.memory_space<vmem>>, vector<8x4xf32>
    %c0_3 = arith.constant 0 : index
    %c0_4 = arith.constant 0 : index
    %2 = vector.load %arg4[%c0_3, %c0_4] : memref<256x32xbf16, #tpu.memory_space<vmem>>, vector<256x32xbf16>
    %3 = arith.truncf %0 : vector<8x256xf32> to vector<8x256xbf16>
    %cst = arith.constant dense<0.000000e+00> : vector<8x32xf32>
    %4 = tpu.matmul %3, %2, %cst {dimension_numbers = #tpu.dot_dimension_numbers<[1], [0], [0], [1], [0, 0, 1, 1], [], []>} : vector<8x256xbf16>, vector<256x32xbf16>, vector<8x32xf32> -> vector<8x32xf32>
    %c0_5 = arith.constant 0 : index
    %c0_6 = arith.constant 0 : index
    %5 = vector.load %arg5[%c0_5, %c0_6] : memref<4x32xbf16, #tpu.memory_space<vmem>>, vector<4x32xbf16>
    %6 = arith.truncf %1 : vector<8x4xf32> to vector<8x4xbf16>
    %cst_7 = arith.constant dense<0.000000e+00> : vector<8x32xf32>
    %7 = tpu.matmul %6, %5, %cst_7 {dimension_numbers = #tpu.dot_dimension_numbers<[1], [0], [0], [1], [0, 0, 1, 1], [], []>} : vector<8x4xbf16>, vector<4x32xbf16>, vector<8x32xf32> -> vector<8x32xf32>
    %8 = arith.addf %4, %7 : vector<8x32xf32>
    %c0_8 = arith.constant 0 : index
    %c0_9 = arith.constant 0 : index
    %9 = vector.load %arg6[%c0_8, %c0_9] : memref<1x32xf32, #tpu.memory_space<vmem>>, vector<1x32xf32>
    %10 = vector.broadcast %9 : vector<1x32xf32> to vector<8x32xf32>
    %11 = arith.addf %8, %10 : vector<8x32xf32>
    %cst_10 = arith.constant dense<0.000000e+00> : vector<8xf32>
    %12 = vector.multi_reduction <add>, %11, %cst_10 [1] : vector<8x32xf32> to vector<8xf32>
    %13 = vector.shape_cast %12 : vector<8xf32> to vector<8x1xf32>
    %cst_11 = arith.constant 3.125000e-02 : f32
    %14 = vector.broadcast %cst_11 : f32 to vector<8x1xf32>
    %15 = arith.mulf %13, %14 : vector<8x1xf32>
    %16 = vector.broadcast %15 : vector<8x1xf32> to vector<8x32xf32>
    %17 = arith.subf %11, %16 : vector<8x32xf32>
    %18 = arith.mulf %17, %17 : vector<8x32xf32>
    %cst_12 = arith.constant dense<0.000000e+00> : vector<8xf32>
    %19 = vector.multi_reduction <add>, %18, %cst_12 [1] : vector<8x32xf32> to vector<8xf32>
    %20 = vector.shape_cast %19 : vector<8xf32> to vector<8x1xf32>
    %cst_13 = arith.constant 3.125000e-02 : f32
    %21 = vector.broadcast %cst_13 : f32 to vector<8x1xf32>
    %22 = arith.mulf %20, %21 : vector<8x1xf32>
    %cst_14 = arith.constant 9.99999974E-6 : f32
    %23 = vector.broadcast %cst_14 : f32 to vector<8x1xf32>
    %24 = arith.addf %22, %23 : vector<8x1xf32>
    %25 = math.rsqrt %24 : vector<8x1xf32>
    %26 = vector.broadcast %25 : vector<8x1xf32> to vector<8x32xf32>
    %27 = arith.mulf %17, %26 : vector<8x32xf32>
    %cst_15 = arith.constant 0.000000e+00 : f32
    %28 = vector.broadcast %cst_15 : f32 to vector<8x32xf32>
    %29 = arith.maximumf %27, %28 : vector<8x32xf32>
    %c0_16 = arith.constant 0 : index
    %c0_17 = arith.constant 0 : index
    %30 = vector.load %arg7[%c0_16, %c0_17] : memref<32x32xbf16, #tpu.memory_space<vmem>>, vector<32x32xbf16>
    %31 = arith.truncf %29 : vector<8x32xf32> to vector<8x32xbf16>
    %cst_18 = arith.constant dense<0.000000e+00> : vector<8x32xf32>
    %32 = tpu.matmul %31, %30, %cst_18 {dimension_numbers = #tpu.dot_dimension_numbers<[1], [0], [0], [1], [0, 0, 1, 1], [], []>} : vector<8x32xbf16>, vector<32x32xbf16>, vector<8x32xf32> -> vector<8x32xf32>
    %c0_19 = arith.constant 0 : index
    %c0_20 = arith.constant 0 : index
    %33 = vector.load %arg8[%c0_19, %c0_20] : memref<1x32xf32, #tpu.memory_space<vmem>>, vector<1x32xf32>
    %34 = vector.broadcast %33 : vector<1x32xf32> to vector<8x32xf32>
    %35 = arith.addf %32, %34 : vector<8x32xf32>
    %cst_21 = arith.constant dense<0.000000e+00> : vector<8xf32>
    %36 = vector.multi_reduction <add>, %35, %cst_21 [1] : vector<8x32xf32> to vector<8xf32>
    %37 = vector.shape_cast %36 : vector<8xf32> to vector<8x1xf32>
    %cst_22 = arith.constant 3.125000e-02 : f32
    %38 = vector.broadcast %cst_22 : f32 to vector<8x1xf32>
    %39 = arith.mulf %37, %38 : vector<8x1xf32>
    %40 = vector.broadcast %39 : vector<8x1xf32> to vector<8x32xf32>
    %41 = arith.subf %35, %40 : vector<8x32xf32>
    %42 = arith.mulf %41, %41 : vector<8x32xf32>
    %cst_23 = arith.constant dense<0.000000e+00> : vector<8xf32>
    %43 = vector.multi_reduction <add>, %42, %cst_23 [1] : vector<8x32xf32> to vector<8xf32>
    %44 = vector.shape_cast %43 : vector<8xf32> to vector<8x1xf32>
    %cst_24 = arith.constant 3.125000e-02 : f32
    %45 = vector.broadcast %cst_24 : f32 to vector<8x1xf32>
    %46 = arith.mulf %44, %45 : vector<8x1xf32>
    %cst_25 = arith.constant 9.99999974E-6 : f32
    %47 = vector.broadcast %cst_25 : f32 to vector<8x1xf32>
    %48 = arith.addf %46, %47 : vector<8x1xf32>
    %49 = math.rsqrt %48 : vector<8x1xf32>
    %50 = vector.broadcast %49 : vector<8x1xf32> to vector<8x32xf32>
    %51 = arith.mulf %41, %50 : vector<8x32xf32>
    %cst_26 = arith.constant 0.000000e+00 : f32
    %52 = vector.broadcast %cst_26 : f32 to vector<8x32xf32>
    %53 = arith.maximumf %51, %52 : vector<8x32xf32>
    %c0_27 = arith.constant 0 : index
    %c0_28 = arith.constant 0 : index
    %54 = vector.load %arg9[%c0_27, %c0_28] : memref<32x16xbf16, #tpu.memory_space<vmem>>, vector<32x16xbf16>
    %55 = arith.truncf %53 : vector<8x32xf32> to vector<8x32xbf16>
    %cst_29 = arith.constant dense<0.000000e+00> : vector<8x16xf32>
    %56 = tpu.matmul %55, %54, %cst_29 {dimension_numbers = #tpu.dot_dimension_numbers<[1], [0], [0], [1], [0, 0, 1, 1], [], []>} : vector<8x32xbf16>, vector<32x16xbf16>, vector<8x16xf32> -> vector<8x16xf32>
    %c0_30 = arith.constant 0 : index
    %c0_31 = arith.constant 0 : index
    %57 = vector.load %arg10[%c0_30, %c0_31] : memref<1x16xf32, #tpu.memory_space<vmem>>, vector<1x16xf32>
    %58 = vector.broadcast %57 : vector<1x16xf32> to vector<8x16xf32>
    %59 = arith.addf %56, %58 : vector<8x16xf32>
    %60 = vector.extract_strided_slice %59 {offsets = [0, 0], sizes = [8, 8], strides = [1, 1]} : vector<8x16xf32> to vector<8x8xf32>
    %61 = vector.extract_strided_slice %59 {offsets = [0, 8], sizes = [8, 8], strides = [1, 1]} : vector<8x16xf32> to vector<8x8xf32>
    %cst_32 = arith.constant 2.000000e+01 : f32
    %62 = vector.broadcast %cst_32 : f32 to vector<8x8xf32>
    %63 = arith.cmpf ogt, %61, %62 : vector<8x8xf32>
    %cst_33 = arith.constant 2.000000e+01 : f32
    %64 = vector.broadcast %cst_33 : f32 to vector<8x8xf32>
    %65 = arith.minimumf %61, %64 : vector<8x8xf32>
    %66 = math.exp %65 : vector<8x8xf32>
    %67 = math.log1p %66 : vector<8x8xf32>
    %68 = arith.select %63, %61, %67 : vector<8x8xi1>, vector<8x8xf32>
    %c0_34 = arith.constant 0 : index
    %c0_35 = arith.constant 0 : index
    %69 = vector.load %arg3[%c0_34, %c0_35] : memref<8x8xf32, #tpu.memory_space<vmem>>, vector<8x8xf32>
    %70 = arith.mulf %68, %69 : vector<8x8xf32>
    %71 = arith.addf %60, %70 : vector<8x8xf32>
    %72 = tpu.concatenate %71, %60, %68 in 1 : vector<8x8xf32>, vector<8x8xf32>, vector<8x8xf32> -> vector<8x24xf32>
    %c0_36 = arith.constant 0 : index
    %c0_37 = arith.constant 0 : index
    %73 = vector.load %arg16[%c0_36, %c0_37] : memref<8x24xf32, #tpu.memory_space<vmem>>, vector<8x24xf32>
    tpu.vector_store %arg16[%c0_36, %c0_37], %72 {strides = array<i32>} : memref<8x24xf32, #tpu.memory_space<vmem>>, vector<8x24xf32>,
    %c0_38 = arith.constant 0 : index
    %c0_39 = arith.constant 0 : index
    %74 = vector.load %arg11[%c0_38, %c0_39] : memref<8x32xbf16, #tpu.memory_space<vmem>>, vector<8x32xbf16>
    %75 = arith.truncf %71 : vector<8x8xf32> to vector<8x8xbf16>
    %cst_40 = arith.constant dense<0.000000e+00> : vector<8x32xf32>
    %76 = tpu.matmul %75, %74, %cst_40 {dimension_numbers = #tpu.dot_dimension_numbers<[1], [0], [0], [1], [0, 0, 1, 1], [], []>} : vector<8x8xbf16>, vector<8x32xbf16>, vector<8x32xf32> -> vector<8x32xf32>
    %c0_41 = arith.constant 0 : index
    %c0_42 = arith.constant 0 : index
    %77 = vector.load %arg12[%c0_41, %c0_42] : memref<4x32xbf16, #tpu.memory_space<vmem>>, vector<4x32xbf16>
    %78 = arith.truncf %1 : vector<8x4xf32> to vector<8x4xbf16>
    %cst_43 = arith.constant dense<0.000000e+00> : vector<8x32xf32>
    %79 = tpu.matmul %78, %77, %cst_43 {dimension_numbers = #tpu.dot_dimension_numbers<[1], [0], [0], [1], [0, 0, 1, 1], [], []>} : vector<8x4xbf16>, vector<4x32xbf16>, vector<8x32xf32> -> vector<8x32xf32>
    %80 = arith.addf %76, %79 : vector<8x32xf32>
    %c0_44 = arith.constant 0 : index
    %c0_45 = arith.constant 0 : index
    %81 = vector.load %arg13[%c0_44, %c0_45] : memref<1x32xf32, #tpu.memory_space<vmem>>, vector<1x32xf32>
    %82 = vector.broadcast %81 : vector<1x32xf32> to vector<8x32xf32>
    %83 = arith.addf %80, %82 : vector<8x32xf32>
    %cst_46 = arith.constant dense<0.000000e+00> : vector<8xf32>
    %84 = vector.multi_reduction <add>, %83, %cst_46 [1] : vector<8x32xf32> to vector<8xf32>
    %85 = vector.shape_cast %84 : vector<8xf32> to vector<8x1xf32>
    %cst_47 = arith.constant 3.125000e-02 : f32
    %86 = vector.broadcast %cst_47 : f32 to vector<8x1xf32>
    %87 = arith.mulf %85, %86 : vector<8x1xf32>
    %88 = vector.broadcast %87 : vector<8x1xf32> to vector<8x32xf32>
    %89 = arith.subf %83, %88 : vector<8x32xf32>
    %90 = arith.mulf %89, %89 : vector<8x32xf32>
    %cst_48 = arith.constant dense<0.000000e+00> : vector<8xf32>
    %91 = vector.multi_reduction <add>, %90, %cst_48 [1] : vector<8x32xf32> to vector<8xf32>
    %92 = vector.shape_cast %91 : vector<8xf32> to vector<8x1xf32>
    %cst_49 = arith.constant 3.125000e-02 : f32
    %93 = vector.broadcast %cst_49 : f32 to vector<8x1xf32>
    %94 = arith.mulf %92, %93 : vector<8x1xf32>
    %cst_50 = arith.constant 9.99999974E-6 : f32
    %95 = vector.broadcast %cst_50 : f32 to vector<8x1xf32>
    %96 = arith.addf %94, %95 : vector<8x1xf32>
    %97 = math.rsqrt %96 : vector<8x1xf32>
    %98 = vector.broadcast %97 : vector<8x1xf32> to vector<8x32xf32>
    %99 = arith.mulf %89, %98 : vector<8x32xf32>
    %cst_51 = arith.constant 0.000000e+00 : f32
    %100 = vector.broadcast %cst_51 : f32 to vector<8x32xf32>
    %101 = arith.maximumf %99, %100 : vector<8x32xf32>
    %c0_52 = arith.constant 0 : index
    %c0_53 = arith.constant 0 : index
    %102 = vector.load %arg14[%c0_52, %c0_53] : memref<32x32xbf16, #tpu.memory_space<vmem>>, vector<32x32xbf16>
    %103 = arith.truncf %101 : vector<8x32xf32> to vector<8x32xbf16>
    %cst_54 = arith.constant dense<0.000000e+00> : vector<8x32xf32>
    %104 = tpu.matmul %103, %102, %cst_54 {dimension_numbers = #tpu.dot_dimension_numbers<[1], [0], [0], [1], [0, 0, 1, 1], [], []>} : vector<8x32xbf16>, vector<32x32xbf16>, vector<8x32xf32> -> vector<8x32xf32>
    %c0_55 = arith.constant 0 : index
    %c0_56 = arith.constant 0 : index
    %105 = vector.load %arg15[%c0_55, %c0_56] : memref<1x32xf32, #tpu.memory_space<vmem>>, vector<1x32xf32>
    %106 = vector.broadcast %105 : vector<1x32xf32> to vector<8x32xf32>
    %107 = arith.addf %104, %106 : vector<8x32xf32>
    %cst_57 = arith.constant dense<0.000000e+00> : vector<8xf32>
    %108 = vector.multi_reduction <add>, %107, %cst_57 [1] : vector<8x32xf32> to vector<8xf32>
    %109 = vector.shape_cast %108 : vector<8xf32> to vector<8x1xf32>
    %cst_58 = arith.constant 3.125000e-02 : f32
    %110 = vector.broadcast %cst_58 : f32 to vector<8x1xf32>
    %111 = arith.mulf %109, %110 : vector<8x1xf32>
    %112 = vector.broadcast %111 : vector<8x1xf32> to vector<8x32xf32>
    %113 = arith.subf %107, %112 : vector<8x32xf32>
    %114 = arith.mulf %113, %113 : vector<8x32xf32>
    %cst_59 = arith.constant dense<0.000000e+00> : vector<8xf32>
    %115 = vector.multi_reduction <add>, %114, %cst_59 [1] : vector<8x32xf32> to vector<8xf32>
    %116 = vector.shape_cast %115 : vector<8xf32> to vector<8x1xf32>
    %cst_60 = arith.constant 3.125000e-02 : f32
    %117 = vector.broadcast %cst_60 : f32 to vector<8x1xf32>
    %118 = arith.mulf %116, %117 : vector<8x1xf32>
    %cst_61 = arith.constant 9.99999974E-6 : f32
    %119 = vector.broadcast %cst_61 : f32 to vector<8x1xf32>
    %120 = arith.addf %118, %119 : vector<8x1xf32>
    %121 = math.rsqrt %120 : vector<8x1xf32>
    %122 = vector.broadcast %121 : vector<8x1xf32> to vector<8x32xf32>
    %123 = arith.mulf %113, %122 : vector<8x32xf32>
    %cst_62 = arith.constant 0.000000e+00 : f32
    %124 = vector.broadcast %cst_62 : f32 to vector<8x32xf32>
    %125 = arith.maximumf %123, %124 : vector<8x32xf32>
    %126 = arith.truncf %125 : vector<8x32xf32> to vector<8x32xbf16>
    %c0_63 = arith.constant 0 : index
    %c0_64 = arith.constant 0 : index
    %127 = vector.load %arg17[%c0_63, %c0_64] : memref<8x32xbf16, #tpu.memory_space<vmem>>, vector<8x32xbf16>
    tpu.vector_store %arg17[%c0_63, %c0_64], %126 {strides = array<i32>} : memref<8x32xbf16, #tpu.memory_space<vmem>>, vector<8x32xbf16>,
    return
  }
  func.func @transform_0(%arg0: i32) -> (i32, i32) {
    %c0_i32 = arith.constant 0 : i32
    %c0_i32_0 = arith.constant 0 : i32
    return %arg0, %c0_i32 : i32, i32
  }
  func.func @transform_1(%arg0: i32) -> (i32, i32) {
    %c0_i32 = arith.constant 0 : i32
    %c0_i32_0 = arith.constant 0 : i32
    return %arg0, %c0_i32 : i32, i32
  }
  func.func @transform_2(%arg0: i32) -> (i32, i32) {
    %c0_i32 = arith.constant 0 : i32
    %c0_i32_0 = arith.constant 0 : i32
    return %arg0, %c0_i32 : i32, i32
  }
  func.func @transform_3(%arg0: i32) -> (i32, i32) {
    %c0_i32 = arith.constant 0 : i32
    %c0_i32_0 = arith.constant 0 : i32
    %c0_i32_1 = arith.constant 0 : i32
    return %c0_i32, %c0_i32_0 : i32, i32
  }
  func.func @transform_4(%arg0: i32) -> (i32, i32) {
    %c0_i32 = arith.constant 0 : i32
    %c0_i32_0 = arith.constant 0 : i32
    %c0_i32_1 = arith.constant 0 : i32
    return %c0_i32, %c0_i32_0 : i32, i32
  }
  func.func @transform_5(%arg0: i32) -> (i32, i32) {
    %c0_i32 = arith.constant 0 : i32
    %c0_i32_0 = arith.constant 0 : i32
    %c0_i32_1 = arith.constant 0 : i32
    return %c0_i32, %c0_i32_0 : i32, i32
  }
  func.func @transform_6(%arg0: i32) -> (i32, i32) {
    %c0_i32 = arith.constant 0 : i32
    %c0_i32_0 = arith.constant 0 : i32
    %c0_i32_1 = arith.constant 0 : i32
    return %c0_i32, %c0_i32_0 : i32, i32
  }
  func.func @transform_7(%arg0: i32) -> (i32, i32) {
    %c0_i32 = arith.constant 0 : i32
    %c0_i32_0 = arith.constant 0 : i32
    %c0_i32_1 = arith.constant 0 : i32
    return %c0_i32, %c0_i32_0 : i32, i32
  }
  func.func @transform_8(%arg0: i32) -> (i32, i32) {
    %c0_i32 = arith.constant 0 : i32
    %c0_i32_0 = arith.constant 0 : i32
    %c0_i32_1 = arith.constant 0 : i32
    return %c0_i32, %c0_i32_0 : i32, i32
  }
  func.func @transform_9(%arg0: i32) -> (i32, i32) {
    %c0_i32 = arith.constant 0 : i32
    %c0_i32_0 = arith.constant 0 : i32
    %c0_i32_1 = arith.constant 0 : i32
    return %c0_i32, %c0_i32_0 : i32, i32
  }
  func.func @transform_10(%arg0: i32) -> (i32, i32) {
    %c0_i32 = arith.constant 0 : i32
    %c0_i32_0 = arith.constant 0 : i32
    %c0_i32_1 = arith.constant 0 : i32
    return %c0_i32, %c0_i32_0 : i32, i32
  }
  func.func @transform_11(%arg0: i32) -> (i32, i32) {
    %c0_i32 = arith.constant 0 : i32
    %c0_i32_0 = arith.constant 0 : i32
    %c0_i32_1 = arith.constant 0 : i32
    return %c0_i32, %c0_i32_0 : i32, i32
  }
  func.func @transform_12(%arg0: i32) -> (i32, i32) {
    %c0_i32 = arith.constant 0 : i32
    %c0_i32_0 = arith.constant 0 : i32
    %c0_i32_1 = arith.constant 0 : i32
    return %c0_i32, %c0_i32_0 : i32, i32
  }
  func.func @transform_13(%arg0: i32) -> (i32, i32) {
    %c0_i32 = arith.constant 0 : i32
    %c0_i32_0 = arith.constant 0 : i32
    %c0_i32_1 = arith.constant 0 : i32
    return %c0_i32, %c0_i32_0 : i32, i32
  }
  func.func @transform_14(%arg0: i32) -> (i32, i32) {
    %c0_i32 = arith.constant 0 : i32
    %c0_i32_0 = arith.constant 0 : i32
    %c0_i32_1 = arith.constant 0 : i32
    return %c0_i32, %c0_i32_0 : i32, i32
  }
  func.func @transform_15(%arg0: i32) -> (i32, i32) {
    %c0_i32 = arith.constant 0 : i32
    %c0_i32_0 = arith.constant 0 : i32
    return %arg0, %c0_i32 : i32, i32
  }
  func.func @transform_16(%arg0: i32) -> (i32, i32) {
    %c0_i32 = arith.constant 0 : i32
    %c0_i32_0 = arith.constant 0 : i32
    return %arg0, %c0_i32 : i32, i32
  }
}

</mosaic_0001>

<llo_original>
// kernel: scvae_batch_forward.3
$region0: #{scvae_batch_forward.3}
  #allocation0 [shape = 'u32[]', space=smem, size = 0x4, offset = 0x4, fixed_abs, tag = 'smem constant byte address 0x4 - core index']
  #allocation1 [shape = 'u32[144,128]{1,0:T(1,128)}', space=vmem, size = 0x12000, scoped, tag = 'internal scratch']
  %s0 = inlined_call_operand.vmem [shape: bf16[16,32], index: 0, kind: input, shape index: {}]
  %s1 = inlined_call_operand.vmem [shape: bf16[32,256], index: 1, kind: input, shape index: {}]
  %s2 = inlined_call_operand.vmem [shape: f32[1,256], index: 2, kind: input, shape index: {}]
  %s3 = inlined_call_operand.hbm [shape: f32[16,256], index: 3, kind: output, shape index: {}]
  %s4 = sld [smem:[#allocation0]]
  $region86: #{scvae_batch_forward.3} parent=0
    _
  %s6 = ssub.s32 1, %s4
  %s7 = scalar_select 0, %s6, %s4
  $region1: #{scvae_batch_forward.3} parent=0
    #allocation2 [shape = 'u8[16384]{0}', space=vmem, size = 0x4000, scoped, tag = 'input window, operand 1']
    #allocation3 [shape = 'u8[8192]{0}', space=vmem, size = 0x2000, scoped, tag = 'output window, operand 0']
    #allocation4 [shape = 's32[2]{0}', space=sflag, size = 0x8, scoped, tag = 'scoped memory for scvae_batch_forward.3']
    %8 = vsyncpa [#allocation4], 0
    %s9 = scalar_lea.sflag [#allocation4], 1
    %10 = vsyncpa %s9, 0
    loop: start=0, step=1, limit=6
    $region2: #{scvae_batch_forward.3} parent=1 // loop_pre_header
      _
    $region3: #{scvae_batch_forward.3} parent=1 // loop_header
      %s12 = sphi 0, %s16
      %p13 = scmp.ge.s32.totalorder %s12, 6
      %s19 = sphi 0, %s31
      %s20 = sphi 0, %s27
      %s21 = sphi 0, %s19
      %s22 = sphi 0, %s20
      %s23 = sphi 0, %s21
      %s24 = sphi 0, %s22
      %s34 = sphi 0, %s36
      %s37 = sphi 0, %s34
      %s38 = sphi 0, %s37
      %s54 = sphi 0, %s38
      %s60 = sphi 0, %s62
      %s63 = sphi 0, %s60
      %s64 = sphi 0, %s63
      %s80 = sphi 0, %s64
      %s86 = sphi 0, %s88
      %s89 = sphi 0, %s86
      %s90 = sphi 0, %s89
      %s106 = sphi 0, %s90
      %s114 = sphi 0, %s116
      %s117 = sphi 0, %s114
      %s118 = sphi 0, %s117
      %s134 = sphi 0, %s118
    $region4: #{scvae_batch_forward.3} parent=1 // loop_header_branch
      %15 = sbr.rel (%p13) target = $region8
    $region5: #{scvae_batch_forward.3} parent=1 // loop_body
      %s17 = ssub.s32 %s12, 1
      %s18 = ssub.s32 %s12, 2
      %s25 = sadd.s32 1, %s20
      %p26 = scmp.ge.s32.totalorder %s25, 2
      %s27 = scalar_select %p26, 0, %s25
      %s28 = sadd.s32 1, %s19
      %s29 = scalar_select %p26, %s28, %s19
      %p30 = scmp.ge.s32.totalorder %s29, 2
      %s31 = scalar_select %p30, 0, %s29
      %s32 = ssub.s32 %s20, %s27
      %p33 = scmp.eq.s32.totalorder %s32, 0
      %s35 = sadd.s32 %s34, 1
      %s36 = scalar_select %p33, %s34, %s35
      %p39 = pneg %p33
      %p40 = scmp.eq.s32.totalorder %s12, 3
      %p41 = por %p39, %p40
      %p42 = scmp.ne.s32.totalorder %s34, %s37
      %p43 = scmp.eq.s32.totalorder %s12, 0
      %p44 = por %p42, %p43
      %p45 = scmp.ne.s32.totalorder %s34, %s37
      %p46 = scmp.eq.s32.totalorder %s17, 3
      %p47 = por %p45, %p46
      %p48 = scmp.ne.s32.totalorder %s37, %s38
      %p49 = scmp.eq.s32.totalorder %s17, 0
      %p50 = por %p48, %p49
      %p51 = scmp.ne.s32.totalorder %s37, %s38
      %p52 = scmp.eq.s32.totalorder %s18, 3
      %p53 = por %p51, %p52
      %p55 = scmp.ne.s32.totalorder %s38, %s54
      %p56 = scmp.eq.s32.totalorder %s18, 0
      %p57 = por %p55, %p56
      %s58 = ssub.s32 %s19, %s31
      %p59 = scmp.eq.s32.totalorder %s58, 0
      %s61 = sadd.s32 %s60, 1
      %s62 = scalar_select %p59, %s60, %s61
      %p65 = pneg %p59
      %p66 = scmp.eq.s32.totalorder %s12, 3
      %p67 = por %p65, %p66
      %p68 = scmp.ne.s32.totalorder %s60, %s63
      %p69 = scmp.eq.s32.totalorder %s12, 0
      %p70 = por %p68, %p69
      %p71 = scmp.ne.s32.totalorder %s60, %s63
      %p72 = scmp.eq.s32.totalorder %s17, 3
      %p73 = por %p71, %p72
      %p74 = scmp.ne.s32.totalorder %s63, %s64
      %p75 = scmp.eq.s32.totalorder %s17, 0
      %p76 = por %p74, %p75
      %p77 = scmp.ne.s32.totalorder %s63, %s64
      %p78 = scmp.eq.s32.totalorder %s18, 3
      %p79 = por %p77, %p78
      %p81 = scmp.ne.s32.totalorder %s64, %s80
      %p82 = scmp.eq.s32.totalorder %s18, 0
      %p83 = por %p81, %p82
      %s84 = ssub.s32 %s19, %s31
      %p85 = scmp.eq.s32.totalorder %s84, 0
      %s87 = sadd.s32 %s86, 1
      %s88 = scalar_select %p85, %s86, %s87
      %p91 = pneg %p85
      %p92 = scmp.eq.s32.totalorder %s12, 3
      %p93 = por %p91, %p92
      %p94 = scmp.ne.s32.totalorder %s86, %s89
      %p95 = scmp.eq.s32.totalorder %s12, 0
      %p96 = por %p94, %p95
      %p97 = scmp.ne.s32.totalorder %s86, %s89
      %p98 = scmp.eq.s32.totalorder %s17, 3
      %p99 = por %p97, %p98
      %p100 = scmp.ne.s32.totalorder %s89, %s90
      %p101 = scmp.eq.s32.totalorder %s17, 0
      %p102 = por %p100, %p101
      %p103 = scmp.ne.s32.totalorder %s89, %s90
      %p104 = scmp.eq.s32.totalorder %s18, 3
      %p105 = por %p103, %p104
      %p107 = scmp.ne.s32.totalorder %s90, %s106
      %p108 = scmp.eq.s32.totalorder %s18, 0
      %p109 = por %p107, %p108
      %s110 = ssub.s32 %s20, %s27
      %s111 = ssub.s32 %s19, %s31
      %s112 = sor.u32 %s110, %s111
      %p113 = scmp.eq.s32.totalorder %s112, 0
      %s115 = sadd.s32 %s114, 1
      %s116 = scalar_select %p113, %s114, %s115
      %p119 = pneg %p113
      %p120 = scmp.eq.s32.totalorder %s12, 3
      %p121 = por %p119, %p120
      %p122 = scmp.ne.s32.totalorder %s114, %s117
      %p123 = scmp.eq.s32.totalorder %s12, 0
      %p124 = por %p122, %p123
      %p125 = scmp.ne.s32.totalorder %s114, %s117
      %p126 = scmp.eq.s32.totalorder %s17, 3
      %p127 = por %p125, %p126
      %p128 = scmp.ne.s32.totalorder %s117, %s118
      %p129 = scmp.eq.s32.totalorder %s17, 0
      %p130 = por %p128, %p129
      %p131 = scmp.ne.s32.totalorder %s117, %s118
      %p132 = scmp.eq.s32.totalorder %s18, 3
      %p133 = por %p131, %p132
      %p135 = scmp.ne.s32.totalorder %s118, %s134
      %p136 = scmp.eq.s32.totalorder %s18, 0
      %p137 = por %p135, %p136
      %p138 = scmp.le.s32.totalorder 1, %s12
      %p139 = scmp.lt.s32.totalorder %s12, 5
      %p140 = pnand %p138, %p139
      %p141 = pneg %p140
      // Predicated region
      $region9: #{scvae_batch_forward.3} parent=5 // pred_check
        _
      $region10: #{scvae_batch_forward.3} parent=5 // pred_check_branch
        %143 = sbr.rel (%p140) target = $region12
      $region11: #{scvae_batch_forward.3} parent=5 // pred_region
        %s144 = ssub.s32 %s12, 1
      $region12: #{scvae_batch_forward.3} parent=5 // pred_fallthru
        _
      %p145 = scmp.lt.s32.totalorder %s12, 4
      // Predicated region
      $region13: #{scvae_batch_forward.3} parent=5 // pred_check
        %p146 = pneg %p145
      $region14: #{scvae_batch_forward.3} parent=5 // pred_check_branch
        %148 = sbr.rel (%p146) target = $region16
      $region15: #{scvae_batch_forward.3} parent=5 // pred_region
        // Predicated region
        $region17: #{scvae_batch_forward.3} parent=15 // pred_check
          %p149 = pneg %p44
        $region18: #{scvae_batch_forward.3} parent=15 // pred_check_branch
          %151 = sbr.rel (%p149) target = $region20
        $region19: #{scvae_batch_forward.3} parent=15 // pred_region
          %p152 = scmp.lt.s32.totalorder %s20, 1
          %s153 = scalar_select %p152, %s20, 1
          %s154 = smul.addr %s153, 4
          %s155 = scalar_lea.vmem %s0, %s154
        $region20: #{scvae_batch_forward.3} parent=15 // pred_fallthru
          _
        // Predicated region
        $region21: #{scvae_batch_forward.3} parent=15 // pred_check
          %p156 = pneg %p70
        $region22: #{scvae_batch_forward.3} parent=15 // pred_check_branch
          %158 = sbr.rel (%p156) target = $region24
        $region23: #{scvae_batch_forward.3} parent=15 // pred_region
          %s159 = sand.u32 %s60, 1
          %s160 = sand.u32 %s60, 1
          %s161 = smul.addr %s160, 16
          %s162 = scalar_lea.vmem [#allocation2], %s161
          %s163 = smul.addr %s19, 4
          %s164 = scalar_lea.vmem %s1, %s163
          // Predicated region
          $region25: #{scvae_batch_forward.3} parent=23 // pred_check
            _
          $region26: #{scvae_batch_forward.3} parent=23 // pred_check_branch
            %166 = sbr.rel (0) target = $region28
          $region27: #{scvae_batch_forward.3} parent=23 // pred_region
            // Predicated region
            $region29: #{scvae_batch_forward.3} parent=27 // pred_check
              _
            $region30: #{scvae_batch_forward.3} parent=27 // pred_check_branch
              %168 = sbr.rel target = $region32
            $region31: #{scvae_batch_forward.3} parent=27 // pred_region
              // Predicated region
              $region44: #{scvae_batch_forward.3} parent=31 // pred_check
                _
              $region45: #{scvae_batch_forward.3} parent=31 // pred_check_branch
                %190 = sbr.rel (0) target = $region47
              $region46: #{scvae_batch_forward.3} parent=31 // pred_region
                loop: start=0, step=1, limit=1
                $region48: #{scvae_batch_forward.3} parent=46 // loop_pre_header
                  _
                $region49: #{scvae_batch_forward.3} parent=46 // loop_header
                  %s192 = sphi 0, %s196
                  %p193 = scmp.ge.s32.totalorder %s192, 1
                  %s197 = sphi %s164, %s164
                  %s198 = sphi %s162, %s162
                $region50: #{scvae_batch_forward.3} parent=46 // loop_header_branch
                  %195 = sbr.rel (%p193) target = $region54
                $region51: #{scvae_batch_forward.3} parent=46 // loop_body
                  _
                $region52: #{scvae_batch_forward.3} parent=46 // loop_footer
                  %s196 = sadd.s32 1, %s192
                $region53: #{scvae_batch_forward.3} parent=46 // loop_footer_branch
                  %191 = sbr.rel target = $region49
                $region54: #{scvae_batch_forward.3} parent=46 // loop_exit
                  _
                %s200 = ssub.s32 16, 1
                loop: start=0, step=1, limit=1
                $region55: #{scvae_batch_forward.3} parent=46 // loop_pre_header
                  _
                $region56: #{scvae_batch_forward.3} parent=46 // loop_header
                  %s202 = sphi 0, %s206
                  %p203 = scmp.ge.s32.totalorder %s202, 1
                  %s207 = sphi %s164, %s164
                  %s208 = sphi %s162, %s162
                $region57: #{scvae_batch_forward.3} parent=46 // loop_header_branch
                  %205 = sbr.rel (%p203) target = $region61
                $region58: #{scvae_batch_forward.3} parent=46 // loop_body
                  %v209 = vld [vmem:[%s207] sm:%s200]
                  %210 = vst [vmem:[%s208] sm:%s200] %v209
                  %v211 = vld [vmem:[%s207 + $0x8] sm:%s200]
                  %212 = vst [vmem:[%s208 + $0x4] sm:%s200] %v211
                  %v213 = vld [vmem:[%s207 + $0x10] sm:%s200]
                  %214 = vst [vmem:[%s208 + $0x8] sm:%s200] %v213
                  %v215 = vld [vmem:[%s207 + $0x18] sm:%s200]
                  %216 = vst [vmem:[%s208 + $0xc] sm:%s200] %v215
                $region59: #{scvae_batch_forward.3} parent=46 // loop_footer
                  %s206 = sadd.s32 1, %s202
                $region60: #{scvae_batch_forward.3} parent=46 // loop_footer_branch
                  %201 = sbr.rel target = $region56
                $region61: #{scvae_batch_forward.3} parent=46 // loop_exit
                  _
              $region47: #{scvae_batch_forward.3} parent=31 // pred_fallthru
                _
            $region32: #{scvae_batch_forward.3} parent=27 // pred_fallthru
              _
            // Predicated region
            $region33: #{scvae_batch_forward.3} parent=27 // pred_check
              _
            $region34: #{scvae_batch_forward.3} parent=27 // pred_check_branch
              %170 = sbr.rel (0) target = $region36
            $region35: #{scvae_batch_forward.3} parent=27 // pred_region
              %s172 = ssub.s32 16, 1
              loop: start=0, step=1, limit=1
              $region37: #{scvae_batch_forward.3} parent=35 // loop_pre_header
                _
              $region38: #{scvae_batch_forward.3} parent=35 // loop_header
                %s174 = sphi 0, %s178
                %p175 = scmp.ge.s32.totalorder %s174, 1
                %s179 = sphi %s164, %s164
                %s180 = sphi %s162, %s162
              $region39: #{scvae_batch_forward.3} parent=35 // loop_header_branch
                %177 = sbr.rel (%p175) target = $region43
              $region40: #{scvae_batch_forward.3} parent=35 // loop_body
                %v181 = vld [vmem:[%s179] sm:%s172]
                %182 = vst [vmem:[%s180] sm:%s172] %v181
                %v183 = vld [vmem:[%s179 + $0x8] sm:%s172]
                %184 = vst [vmem:[%s180 + $0x4] sm:%s172] %v183
                %v185 = vld [vmem:[%s179 + $0x10] sm:%s172]
                %186 = vst [vmem:[%s180 + $0x8] sm:%s172] %v185
                %v187 = vld [vmem:[%s179 + $0x18] sm:%s172]
                %188 = vst [vmem:[%s180 + $0xc] sm:%s172] %v187
              $region41: #{scvae_batch_forward.3} parent=35 // loop_footer
                %s178 = sadd.s32 1, %s174
              $region42: #{scvae_batch_forward.3} parent=35 // loop_footer_branch
                %173 = sbr.rel target = $region38
              $region43: #{scvae_batch_forward.3} parent=35 // loop_exit
                _
            $region36: #{scvae_batch_forward.3} parent=27 // pred_fallthru
              _
          $region28: #{scvae_batch_forward.3} parent=23 // pred_fallthru
            _
          %217 = vnop
        $region24: #{scvae_batch_forward.3} parent=15 // pred_fallthru
          _
        // Predicated region
        $region62: #{scvae_batch_forward.3} parent=15 // pred_check
          %p218 = pneg %p96
        $region63: #{scvae_batch_forward.3} parent=15 // pred_check_branch
          %220 = sbr.rel (%p218) target = $region65
        $region64: #{scvae_batch_forward.3} parent=15 // pred_region
          %p221 = scmp.lt.s32.totalorder %s19, 1
          %s222 = scalar_select %p221, %s19, 1
          %s223 = scalar_lea.vmem %s2, %s222
        $region65: #{scvae_batch_forward.3} parent=15 // pred_fallthru
          _
      $region16: #{scvae_batch_forward.3} parent=5 // pred_fallthru
        _
      %p224 = scmp.le.s32.totalorder 1, %s12
      %p225 = scmp.lt.s32.totalorder %s12, 5
      %p226 = pnand %p224, %p225
      %p227 = pneg %p226
      // Predicated region
      $region66: #{scvae_batch_forward.3} parent=5 // pred_check
        _
      $region67: #{scvae_batch_forward.3} parent=5 // pred_check_branch
        %229 = sbr.rel (%p226) target = $region69
      $region68: #{scvae_batch_forward.3} parent=5 // pred_region
        %s230 = ssub.s32 %s12, 1
        %s231 = sand.u32 %s63, 1
        %s232 = sand.u32 %s63, 1
        %s233 = smul.addr %s232, 16
        %s234 = scalar_lea.vmem [#allocation2], %s233
        // Predicated region
        $region70: #{scvae_batch_forward.3} parent=68 // pred_check
          %p235 = pneg %p76
        $region71: #{scvae_batch_forward.3} parent=68 // pred_check_branch
          %237 = sbr.rel (%p235) target = $region73
        $region72: #{scvae_batch_forward.3} parent=68 // pred_region
          _
        $region73: #{scvae_batch_forward.3} parent=68 // pred_fallthru
          _
        %p238 = scmp.lt.s32.totalorder %s22, 1
        %s239 = scalar_select %p238, %s22, 1
        %s240 = smul.addr %s239, 4
        %s241 = scalar_lea.vmem %s0, %s240
        %p242 = pneg %p50
        %p243 = pneg %p47
        %s244 = sand.u32 %s63, 1
        %s245 = sand.u32 %s63, 1
        %s246 = smul.addr %s245, 16
        %s247 = scalar_lea.vmem [#allocation2], %s246
        %p248 = pneg %p76
        %p249 = pneg %p73
        %p250 = scmp.lt.s32.totalorder %s21, 1
        %s251 = scalar_select %p250, %s21, 1
        %s252 = scalar_lea.vmem %s2, %s251
        %p253 = pneg %p102
        %p254 = pneg %p99
        %p255 = pneg %p130
        %p256 = pneg %p127
        %s257 = sand.u32 %s117, 1
        %s258 = scalar_lea.sflag [#allocation4], %s257
        %s259 = sand.u32 %s117, 1
        %s260 = smul.addr %s259, 8
        %s261 = scalar_lea.vmem [#allocation3], %s260
        %p262 = scmp.lt.s32.totalorder %s22, 1
        %s263 = scalar_select %p262, %s22, 1
        %s264 = smul.addr %s263, 4
        %s265 = scalar_lea.vmem %s0, %s264
        %p266 = scmp.lt.s32.totalorder %s21, 1
        %s267 = scalar_select %p266, %s21, 1
        %s268 = scalar_lea.vmem %s2, %s267
        %v270 = vld [vmem:[%s265] sm:$0xf]
        %v271 = vld [vmem:[%s234] sm:$0xf]
        %v272 = vld [vmem:[%s234 + $0x4] sm:$0xf]
        %v273 = vld [vmem:[%s234 + $0x8] sm:$0xf]
        %v274 = vld [vmem:[%s234 + $0xc] sm:$0xf]
        %v275 = vld [vmem:[%s268] sm:$0x1]
        %v277 = vlaneseq
        %v278 = vshrl.u32 %v277, 7
        %v279 = vsub.s32 0, %v278
        %v280 = vrot.slane %v275, %v279
        %v286 = vunpack.c.l.b16 %v271
        %v287 = vunpack.c.l.b16 %v272
        %v288 = vunpack.c.l.b16 %v273
        %v289 = vunpack.c.l.b16 %v274
        %v290 = vpack.c.b16 %v287, %v286
        %v291 = vpack.c.b16 %v289, %v288
        %vm294 = vcmask 261120
        %v296 = vsel %vm294, %v270, 0
        %298 = vmatprep.subr.bf16.mxu0 0
        %299 = vmatpush1.bf16.msra.mxu0 0
        %300 = vmatprep.subr.bf16.mxu0 0
        %301 = vmatpush1.bf16.msra.mxu0 0
        %302 = vmatprep.subr.bf16.mxu0 0
        %303 = vmatpush1.bf16.msra.mxu0 0
        %304 = vmatprep.subr.bf16.mxu0 0
        %305 = vmatpush1.bf16.msra.mxu0 0
        %306 = vmatprep.subr.bf16.mxu0 0
        %307 = vmatpush1.bf16.msra.mxu0 0
        %308 = vmatprep.subr.bf16.mxu0 0
        %309 = vmatpush1.bf16.msra.mxu0 0
        %310 = vmatprep.subr.bf16.mxu0 0
        %311 = vmatpush1.bf16.msra.mxu0 %v291
        %312 = vmatprep.subr.bf16.mxu0 0
        %313 = vmatpush1.bf16.msra.mxu0 %v290
        %314 = vmatprep.subr.bf16.mxu0 0
        %315 = vmatpush2.bf16.msra.mxu0 0
        %316 = vmatprep.subr.bf16.mxu0 0
        %317 = vmatpush2.bf16.msra.mxu0 0
        %318 = vmatprep.subr.bf16.mxu0 0
        %319 = vmatpush2.bf16.msra.mxu0 0
        %320 = vmatprep.subr.bf16.mxu0 0
        %321 = vmatpush2.bf16.msra.mxu0 0
        %322 = vmatprep.subr.bf16.mxu0 0
        %323 = vmatpush2.bf16.msra.mxu0 0
        %324 = vmatprep.subr.bf16.mxu0 0
        %325 = vmatpush2.bf16.msra.mxu0 0
        %326 = vmatprep.subr.bf16.mxu0 0
        %327 = vmatpush2.bf16.msra.mxu0 0
        %328 = vmatprep.subr.bf16.mxu0 0
        %329 = vmatpush2.bf16.msra.mxu0 0
        %330 = vmatprep.mubr.bf16.mxu0 0
        %331 = vmatmul.mubr.bf16.gmra.mxu0 %v296
        %v332 = vpop.f32.mrf.mxu0
        %v333 = vadd.f32 %v280, %v332
        %v334 = vpop.f32.mrf.mxu0
        %v335 = vpop.f32.mrf.mxu0
        %v336 = vpop.f32.mrf.mxu0
        %337 = vdwg.mxu0
        %vm338 = vcmp.gt.f32.partialorder %v333, 20.0
        %v339 = vmin.f32 %v333, 20.0
        %v340 = vmul.f32 %v339, 1.442695
        %v341 = vpow.pop %v340
        %v342 = vadd.f32 %v341, 1.0
        %v343 = vlog2.pop %v342
        %v344 = vmul.f32 %v343, 0.6931472
        %v345 = vmul.f32 -0.5, %v341
        %v346 = vadd.f32 %v345, 1.0
        %v347 = vmul.f32 %v346, %v341
        %v348 = vand.u32 2147483647, %v341
        %vm349 = vcmp.lt.f32.partialorder %v348, 0.0004427343
        %v350 = vsel %vm349, %v347, %v344
        %v351 = vsel %vm338, %v333, %v350
        %352 = vst [vmem:[%s261] sm:$0xff] %v351
        %s353 = sand.u32 %s117, 1
        %s354 = scalar_lea.sflag [#allocation4], %s353
        %s355 = sand.u32 %s117, 1
        %s356 = smul.addr %s355, 8
        %s357 = scalar_lea.vmem [#allocation3], %s356
        // Predicated region
        $region74: #{scvae_batch_forward.3} parent=68 // pred_check
          %p358 = pneg %p127
        $region75: #{scvae_batch_forward.3} parent=68 // pred_check_branch
          %360 = sbr.rel (%p358) target = $region77
        $region76: #{scvae_batch_forward.3} parent=68 // pred_region
          %s362 = ssub.s32 128, 128
          %363 = vsyncadd %s354, %s362
          %s364 = smul.addr %s22, 2
          %s365 = sadd.s32 %s21, %s364
          %s366 = smul.addr %s365, 128
          %s367 = scalar_lea.hbm %s3, %s366
          %s369 = sshll.u32 %s357, 4
          %s370 = int_to_ptr.vmem [resolvable:$true] %s369
          %372 = dma.vmem_to_hbm [thread:$0]  %s370, 128, %s367, %s354
        $region77: #{scvae_batch_forward.3} parent=68 // pred_fallthru
          _
      $region69: #{scvae_batch_forward.3} parent=5 // pred_fallthru
        _
      %p373 = scmp.le.s32.totalorder 2, %s12
      // Predicated region
      $region78: #{scvae_batch_forward.3} parent=5 // pred_check
        %p374 = pneg %p373
      $region79: #{scvae_batch_forward.3} parent=5 // pred_check_branch
        %376 = sbr.rel (%p374) target = $region81
      $region80: #{scvae_batch_forward.3} parent=5 // pred_region
        %s377 = ssub.s32 %s12, 2
        // Predicated region
        $region82: #{scvae_batch_forward.3} parent=80 // pred_check
          %p378 = pneg %p133
        $region83: #{scvae_batch_forward.3} parent=80 // pred_check_branch
          %380 = sbr.rel (%p378) target = $region85
        $region84: #{scvae_batch_forward.3} parent=80 // pred_region
          %s381 = sand.u32 %s118, 1
          %s382 = scalar_lea.sflag [#allocation4], %s381
          %s383 = sand.u32 %s118, 1
          %s384 = smul.addr %s383, 8
          %s385 = scalar_lea.vmem [#allocation3], %s384
          %386 = dma.done %s382, 128
        $region85: #{scvae_batch_forward.3} parent=80 // pred_fallthru
          _
      $region81: #{scvae_batch_forward.3} parent=5 // pred_fallthru
        _
    $region6: #{scvae_batch_forward.3} parent=1 // loop_footer
      %s16 = sadd.s32 1, %s12
    $region7: #{scvae_batch_forward.3} parent=1 // loop_footer_branch
      %11 = sbr.rel target = $region3
    $region8: #{scvae_batch_forward.3} parent=1 // loop_exit
      _
    %387 = vsyncpa [#allocation4], 1
    %s388 = scalar_lea.sflag [#allocation4], 1
    %389 = vsyncpa %s388, 1

// kernel: scvae_batch_forward.2
$region0: #{scvae_batch_forward.2}
  #allocation0 [shape = 'u32[]', space=smem, size = 0x4, offset = 0x4, fixed_abs, tag = 'smem constant byte address 0x4 - core index']
  #allocation1 [shape = 'u32[144,128]{1,0:T(1,128)}', space=vmem, size = 0x12000, scoped, tag = 'internal scratch']
  %s0 = inlined_call_operand.vmem [shape: f32[16,256], index: 0, kind: input, shape index: {}]
  %s1 = inlined_call_operand.vmem [shape: f32[16,4], index: 1, kind: input, shape index: {}]
  %s2 = inlined_call_operand.vmem [shape: f32[16,8], index: 2, kind: input, shape index: {}]
  %s3 = inlined_call_operand.vmem [shape: bf16[256,32], index: 3, kind: input, shape index: {}]
  %s4 = inlined_call_operand.vmem [shape: bf16[4,32], index: 4, kind: input, shape index: {}]
  %s5 = inlined_call_operand.vmem [shape: f32[1,32], index: 5, kind: input, shape index: {}]
  %s6 = inlined_call_operand.vmem [shape: bf16[32,32], index: 6, kind: input, shape index: {}]
  %s7 = inlined_call_operand.vmem [shape: f32[1,32], index: 7, kind: input, shape index: {}]
  %s8 = inlined_call_operand.vmem [shape: bf16[32,16], index: 8, kind: input, shape index: {}]
  %s9 = inlined_call_operand.vmem [shape: f32[1,16], index: 9, kind: input, shape index: {}]
  %s10 = inlined_call_operand.vmem [shape: bf16[8,32], index: 10, kind: input, shape index: {}]
  %s11 = inlined_call_operand.vmem [shape: bf16[4,32], index: 11, kind: input, shape index: {}]
  %s12 = inlined_call_operand.vmem [shape: f32[1,32], index: 12, kind: input, shape index: {}]
  %s13 = inlined_call_operand.vmem [shape: bf16[32,32], index: 13, kind: input, shape index: {}]
  %s14 = inlined_call_operand.vmem [shape: f32[1,32], index: 14, kind: input, shape index: {}]
  %s15 = inlined_call_operand.vmem [shape: f32[16,24], index: 15, kind: output, shape index: {0}]
  %s16 = inlined_call_operand.vmem [shape: bf16[16,32], index: 16, kind: output, shape index: {1}]
  %17 = xla_tuple %s15, %s16
  %s18 = sld [smem:[#allocation0]]
  $region101: #{scvae_batch_forward.2} parent=0
    _
  %s20 = ssub.s32 1, %s18
  %s21 = scalar_select 0, %s20, %s18
  loop: start=0, step=1, limit=4
  $region2: #{scvae_batch_forward.2} parent=0 // loop_pre_header
    _
  $region3: #{scvae_batch_forward.2} parent=0 // loop_header
    %s23 = sphi 0, %s27
    %p24 = scmp.ge.s32.totalorder %s23, 4
    %s33 = sphi 0, %s35
    %s36 = sphi 0, %s33
    %s37 = sphi 0, %s36
    %s53 = sphi 0, %s37
    %s59 = sphi 0, %s61
    %s62 = sphi 0, %s59
    %s63 = sphi 0, %s62
    %s79 = sphi 0, %s63
    %s85 = sphi 0, %s87
    %s88 = sphi 0, %s85
    %s89 = sphi 0, %s88
    %s105 = sphi 0, %s89
    %s109 = sphi 0, %s109
    %s111 = sphi 0, %s109
    %s112 = sphi 0, %s111
    %s126 = sphi 0, %s112
    %s130 = sphi 0, %s130
    %s132 = sphi 0, %s130
    %s133 = sphi 0, %s132
    %s147 = sphi 0, %s133
    %s151 = sphi 0, %s151
    %s153 = sphi 0, %s151
    %s154 = sphi 0, %s153
    %s168 = sphi 0, %s154
    %s172 = sphi 0, %s172
    %s174 = sphi 0, %s172
    %s175 = sphi 0, %s174
    %s189 = sphi 0, %s175
    %s193 = sphi 0, %s193
    %s195 = sphi 0, %s193
    %s196 = sphi 0, %s195
    %s210 = sphi 0, %s196
    %s214 = sphi 0, %s214
    %s216 = sphi 0, %s214
    %s217 = sphi 0, %s216
    %s231 = sphi 0, %s217
    %s235 = sphi 0, %s235
    %s237 = sphi 0, %s235
    %s238 = sphi 0, %s237
    %s252 = sphi 0, %s238
    %s256 = sphi 0, %s256
    %s258 = sphi 0, %s256
    %s259 = sphi 0, %s258
    %s273 = sphi 0, %s259
    %s277 = sphi 0, %s277
    %s279 = sphi 0, %s277
    %s280 = sphi 0, %s279
    %s294 = sphi 0, %s280
    %s298 = sphi 0, %s298
    %s300 = sphi 0, %s298
    %s301 = sphi 0, %s300
    %s315 = sphi 0, %s301
    %s319 = sphi 0, %s319
    %s321 = sphi 0, %s319
    %s322 = sphi 0, %s321
    %s336 = sphi 0, %s322
    %s340 = sphi 0, %s340
    %s342 = sphi 0, %s340
    %s343 = sphi 0, %s342
    %s357 = sphi 0, %s343
    %s363 = sphi 0, %s365
    %s366 = sphi 0, %s363
    %s367 = sphi 0, %s366
    %s383 = sphi 0, %s367
    %s389 = sphi 0, %s391
    %s392 = sphi 0, %s389
    %s393 = sphi 0, %s392
    %s409 = sphi 0, %s393
  $region4: #{scvae_batch_forward.2} parent=0 // loop_header_branch
    %26 = sbr.rel (%p24) target = $region8
  $region5: #{scvae_batch_forward.2} parent=0 // loop_body
    %s28 = ssub.s32 %s23, 1
    %s29 = ssub.s32 %s23, 2
    %s30 = sadd.s32 %s23, 1
    %s31 = ssub.s32 %s23, %s30
    %p32 = scmp.eq.s32.totalorder %s31, 0
    %s34 = sadd.s32 %s33, 1
    %s35 = scalar_select %p32, %s33, %s34
    %p38 = pneg %p32
    %p39 = scmp.eq.s32.totalorder %s23, 1
    %p40 = por %p38, %p39
    %p41 = scmp.ne.s32.totalorder %s33, %s36
    %p42 = scmp.eq.s32.totalorder %s23, 0
    %p43 = por %p41, %p42
    %p44 = scmp.ne.s32.totalorder %s33, %s36
    %p45 = scmp.eq.s32.totalorder %s28, 1
    %p46 = por %p44, %p45
    %p47 = scmp.ne.s32.totalorder %s36, %s37
    %p48 = scmp.eq.s32.totalorder %s28, 0
    %p49 = por %p47, %p48
    %p50 = scmp.ne.s32.totalorder %s36, %s37
    %p51 = scmp.eq.s32.totalorder %s29, 1
    %p52 = por %p50, %p51
    %p54 = scmp.ne.s32.totalorder %s37, %s53
    %p55 = scmp.eq.s32.totalorder %s29, 0
    %p56 = por %p54, %p55
    %s57 = ssub.s32 %s23, %s30
    %p58 = scmp.eq.s32.totalorder %s57, 0
    %s60 = sadd.s32 %s59, 1
    %s61 = scalar_select %p58, %s59, %s60
    %p64 = pneg %p58
    %p65 = scmp.eq.s32.totalorder %s23, 1
    %p66 = por %p64, %p65
    %p67 = scmp.ne.s32.totalorder %s59, %s62
    %p68 = scmp.eq.s32.totalorder %s23, 0
    %p69 = por %p67, %p68
    %p70 = scmp.ne.s32.totalorder %s59, %s62
    %p71 = scmp.eq.s32.totalorder %s28, 1
    %p72 = por %p70, %p71
    %p73 = scmp.ne.s32.totalorder %s62, %s63
    %p74 = scmp.eq.s32.totalorder %s28, 0
    %p75 = por %p73, %p74
    %p76 = scmp.ne.s32.totalorder %s62, %s63
    %p77 = scmp.eq.s32.totalorder %s29, 1
    %p78 = por %p76, %p77
    %p80 = scmp.ne.s32.totalorder %s63, %s79
    %p81 = scmp.eq.s32.totalorder %s29, 0
    %p82 = por %p80, %p81
    %s83 = ssub.s32 %s23, %s30
    %p84 = scmp.eq.s32.totalorder %s83, 0
    %s86 = sadd.s32 %s85, 1
    %s87 = scalar_select %p84, %s85, %s86
    %p90 = pneg %p84
    %p91 = scmp.eq.s32.totalorder %s23, 1
    %p92 = por %p90, %p91
    %p93 = scmp.ne.s32.totalorder %s85, %s88
    %p94 = scmp.eq.s32.totalorder %s23, 0
    %p95 = por %p93, %p94
    %p96 = scmp.ne.s32.totalorder %s85, %s88
    %p97 = scmp.eq.s32.totalorder %s28, 1
    %p98 = por %p96, %p97
    %p99 = scmp.ne.s32.totalorder %s88, %s89
    %p100 = scmp.eq.s32.totalorder %s28, 0
    %p101 = por %p99, %p100
    %p102 = scmp.ne.s32.totalorder %s88, %s89
    %p103 = scmp.eq.s32.totalorder %s29, 1
    %p104 = por %p102, %p103
    %p106 = scmp.ne.s32.totalorder %s89, %s105
    %p107 = scmp.eq.s32.totalorder %s29, 0
    %p108 = por %p106, %p107
    %s110 = sadd.s32 %s109, 1
    %p113 = scmp.eq.s32.totalorder %s23, 1
    %p114 = scmp.ne.s32.totalorder %s109, %s111
    %p115 = scmp.eq.s32.totalorder %s23, 0
    %p116 = por %p114, %p115
    %p117 = scmp.ne.s32.totalorder %s109, %s111
    %p118 = scmp.eq.s32.totalorder %s28, 1
    %p119 = por %p117, %p118
    %p120 = scmp.ne.s32.totalorder %s111, %s112
    %p121 = scmp.eq.s32.totalorder %s28, 0
    %p122 = por %p120, %p121
    %p123 = scmp.ne.s32.totalorder %s111, %s112
    %p124 = scmp.eq.s32.totalorder %s29, 1
    %p125 = por %p123, %p124
    %p127 = scmp.ne.s32.totalorder %s112, %s126
    %p128 = scmp.eq.s32.totalorder %s29, 0
    %p129 = por %p127, %p128
    %s131 = sadd.s32 %s130, 1
    %p134 = scmp.eq.s32.totalorder %s23, 1
    %p135 = scmp.ne.s32.totalorder %s130, %s132
    %p136 = scmp.eq.s32.totalorder %s23, 0
    %p137 = por %p135, %p136
    %p138 = scmp.ne.s32.totalorder %s130, %s132
    %p139 = scmp.eq.s32.totalorder %s28, 1
    %p140 = por %p138, %p139
    %p141 = scmp.ne.s32.totalorder %s132, %s133
    %p142 = scmp.eq.s32.totalorder %s28, 0
    %p143 = por %p141, %p142
    %p144 = scmp.ne.s32.totalorder %s132, %s133
    %p145 = scmp.eq.s32.totalorder %s29, 1
    %p146 = por %p144, %p145
    %p148 = scmp.ne.s32.totalorder %s133, %s147
    %p149 = scmp.eq.s32.totalorder %s29, 0
    %p150 = por %p148, %p149
    %s152 = sadd.s32 %s151, 1
    %p155 = scmp.eq.s32.totalorder %s23, 1
    %p156 = scmp.ne.s32.totalorder %s151, %s153
    %p157 = scmp.eq.s32.totalorder %s23, 0
    %p158 = por %p156, %p157
    %p159 = scmp.ne.s32.totalorder %s151, %s153
    %p160 = scmp.eq.s32.totalorder %s28, 1
    %p161 = por %p159, %p160
    %p162 = scmp.ne.s32.totalorder %s153, %s154
    %p163 = scmp.eq.s32.totalorder %s28, 0
    %p164 = por %p162, %p163
    %p165 = scmp.ne.s32.totalorder %s153, %s154
    %p166 = scmp.eq.s32.totalorder %s29, 1
    %p167 = por %p165, %p166
    %p169 = scmp.ne.s32.totalorder %s154, %s168
    %p170 = scmp.eq.s32.totalorder %s29, 0
    %p171 = por %p169, %p170
    %s173 = sadd.s32 %s172, 1
    %p176 = scmp.eq.s32.totalorder %s23, 1
    %p177 = scmp.ne.s32.totalorder %s172, %s174
    %p178 = scmp.eq.s32.totalorder %s23, 0
    %p179 = por %p177, %p178
    %p180 = scmp.ne.s32.totalorder %s172, %s174
    %p181 = scmp.eq.s32.totalorder %s28, 1
    %p182 = por %p180, %p181
    %p183 = scmp.ne.s32.totalorder %s174, %s175
    %p184 = scmp.eq.s32.totalorder %s28, 0
    %p185 = por %p183, %p184
    %p186 = scmp.ne.s32.totalorder %s174, %s175
    %p187 = scmp.eq.s32.totalorder %s29, 1
    %p188 = por %p186, %p187
    %p190 = scmp.ne.s32.totalorder %s175, %s189
    %p191 = scmp.eq.s32.totalorder %s29, 0
    %p192 = por %p190, %p191
    %s194 = sadd.s32 %s193, 1
    %p197 = scmp.eq.s32.totalorder %s23, 1
    %p198 = scmp.ne.s32.totalorder %s193, %s195
    %p199 = scmp.eq.s32.totalorder %s23, 0
    %p200 = por %p198, %p199
    %p201 = scmp.ne.s32.totalorder %s193, %s195
    %p202 = scmp.eq.s32.totalorder %s28, 1
    %p203 = por %p201, %p202
    %p204 = scmp.ne.s32.totalorder %s195, %s196
    %p205 = scmp.eq.s32.totalorder %s28, 0
    %p206 = por %p204, %p205
    %p207 = scmp.ne.s32.totalorder %s195, %s196
    %p208 = scmp.eq.s32.totalorder %s29, 1
    %p209 = por %p207, %p208
    %p211 = scmp.ne.s32.totalorder %s196, %s210
    %p212 = scmp.eq.s32.totalorder %s29, 0
    %p213 = por %p211, %p212
    %s215 = sadd.s32 %s214, 1
    %p218 = scmp.eq.s32.totalorder %s23, 1
    %p219 = scmp.ne.s32.totalorder %s214, %s216
    %p220 = scmp.eq.s32.totalorder %s23, 0
    %p221 = por %p219, %p220
    %p222 = scmp.ne.s32.totalorder %s214, %s216
    %p223 = scmp.eq.s32.totalorder %s28, 1
    %p224 = por %p222, %p223
    %p225 = scmp.ne.s32.totalorder %s216, %s217
    %p226 = scmp.eq.s32.totalorder %s28, 0
    %p227 = por %p225, %p226
    %p228 = scmp.ne.s32.totalorder %s216, %s217
    %p229 = scmp.eq.s32.totalorder %s29, 1
    %p230 = por %p228, %p229
    %p232 = scmp.ne.s32.totalorder %s217, %s231
    %p233 = scmp.eq.s32.totalorder %s29, 0
    %p234 = por %p232, %p233
    %s236 = sadd.s32 %s235, 1
    %p239 = scmp.eq.s32.totalorder %s23, 1
    %p240 = scmp.ne.s32.totalorder %s235, %s237
    %p241 = scmp.eq.s32.totalorder %s23, 0
    %p242 = por %p240, %p241
    %p243 = scmp.ne.s32.totalorder %s235, %s237
    %p244 = scmp.eq.s32.totalorder %s28, 1
    %p245 = por %p243, %p244
    %p246 = scmp.ne.s32.totalorder %s237, %s238
    %p247 = scmp.eq.s32.totalorder %s28, 0
    %p248 = por %p246, %p247
    %p249 = scmp.ne.s32.totalorder %s237, %s238
    %p250 = scmp.eq.s32.totalorder %s29, 1
    %p251 = por %p249, %p250
    %p253 = scmp.ne.s32.totalorder %s238, %s252
    %p254 = scmp.eq.s32.totalorder %s29, 0
    %p255 = por %p253, %p254
    %s257 = sadd.s32 %s256, 1
    %p260 = scmp.eq.s32.totalorder %s23, 1
    %p261 = scmp.ne.s32.totalorder %s256, %s258
    %p262 = scmp.eq.s32.totalorder %s23, 0
    %p263 = por %p261, %p262
    %p264 = scmp.ne.s32.totalorder %s256, %s258
    %p265 = scmp.eq.s32.totalorder %s28, 1
    %p266 = por %p264, %p265
    %p267 = scmp.ne.s32.totalorder %s258, %s259
    %p268 = scmp.eq.s32.totalorder %s28, 0
    %p269 = por %p267, %p268
    %p270 = scmp.ne.s32.totalorder %s258, %s259
    %p271 = scmp.eq.s32.totalorder %s29, 1
    %p272 = por %p270, %p271
    %p274 = scmp.ne.s32.totalorder %s259, %s273
    %p275 = scmp.eq.s32.totalorder %s29, 0
    %p276 = por %p274, %p275
    %s278 = sadd.s32 %s277, 1
    %p281 = scmp.eq.s32.totalorder %s23, 1
    %p282 = scmp.ne.s32.totalorder %s277, %s279
    %p283 = scmp.eq.s32.totalorder %s23, 0
    %p284 = por %p282, %p283
    %p285 = scmp.ne.s32.totalorder %s277, %s279
    %p286 = scmp.eq.s32.totalorder %s28, 1
    %p287 = por %p285, %p286
    %p288 = scmp.ne.s32.totalorder %s279, %s280
    %p289 = scmp.eq.s32.totalorder %s28, 0
    %p290 = por %p288, %p289
    %p291 = scmp.ne.s32.totalorder %s279, %s280
    %p292 = scmp.eq.s32.totalorder %s29, 1
    %p293 = por %p291, %p292
    %p295 = scmp.ne.s32.totalorder %s280, %s294
    %p296 = scmp.eq.s32.totalorder %s29, 0
    %p297 = por %p295, %p296
    %s299 = sadd.s32 %s298, 1
    %p302 = scmp.eq.s32.totalorder %s23, 1
    %p303 = scmp.ne.s32.totalorder %s298, %s300
    %p304 = scmp.eq.s32.totalorder %s23, 0
    %p305 = por %p303, %p304
    %p306 = scmp.ne.s32.totalorder %s298, %s300
    %p307 = scmp.eq.s32.totalorder %s28, 1
    %p308 = por %p306, %p307
    %p309 = scmp.ne.s32.totalorder %s300, %s301
    %p310 = scmp.eq.s32.totalorder %s28, 0
    %p311 = por %p309, %p310
    %p312 = scmp.ne.s32.totalorder %s300, %s301
    %p313 = scmp.eq.s32.totalorder %s29, 1
    %p314 = por %p312, %p313
    %p316 = scmp.ne.s32.totalorder %s301, %s315
    %p317 = scmp.eq.s32.totalorder %s29, 0
    %p318 = por %p316, %p317
    %s320 = sadd.s32 %s319, 1
    %p323 = scmp.eq.s32.totalorder %s23, 1
    %p324 = scmp.ne.s32.totalorder %s319, %s321
    %p325 = scmp.eq.s32.totalorder %s23, 0
    %p326 = por %p324, %p325
    %p327 = scmp.ne.s32.totalorder %s319, %s321
    %p328 = scmp.eq.s32.totalorder %s28, 1
    %p329 = por %p327, %p328
    %p330 = scmp.ne.s32.totalorder %s321, %s322
    %p331 = scmp.eq.s32.totalorder %s28, 0
    %p332 = por %p330, %p331
    %p333 = scmp.ne.s32.totalorder %s321, %s322
    %p334 = scmp.eq.s32.totalorder %s29, 1
    %p335 = por %p333, %p334
    %p337 = scmp.ne.s32.totalorder %s322, %s336
    %p338 = scmp.eq.s32.totalorder %s29, 0
    %p339 = por %p337, %p338
    %s341 = sadd.s32 %s340, 1
    %p344 = scmp.eq.s32.totalorder %s23, 1
    %p345 = scmp.ne.s32.totalorder %s340, %s342
    %p346 = scmp.eq.s32.totalorder %s23, 0
    %p347 = por %p345, %p346
    %p348 = scmp.ne.s32.totalorder %s340, %s342
    %p349 = scmp.eq.s32.totalorder %s28, 1
    %p350 = por %p348, %p349
    %p351 = scmp.ne.s32.totalorder %s342, %s343
    %p352 = scmp.eq.s32.totalorder %s28, 0
    %p353 = por %p351, %p352
    %p354 = scmp.ne.s32.totalorder %s342, %s343
    %p355 = scmp.eq.s32.totalorder %s29, 1
    %p356 = por %p354, %p355
    %p358 = scmp.ne.s32.totalorder %s343, %s357
    %p359 = scmp.eq.s32.totalorder %s29, 0
    %p360 = por %p358, %p359
    %s361 = ssub.s32 %s23, %s30
    %p362 = scmp.eq.s32.totalorder %s361, 0
    %s364 = sadd.s32 %s363, 1
    %s365 = scalar_select %p362, %s363, %s364
    %p368 = pneg %p362
    %p369 = scmp.eq.s32.totalorder %s23, 1
    %p370 = por %p368, %p369
    %p371 = scmp.ne.s32.totalorder %s363, %s366
    %p372 = scmp.eq.s32.totalorder %s23, 0
    %p373 = por %p371, %p372
    %p374 = scmp.ne.s32.totalorder %s363, %s366
    %p375 = scmp.eq.s32.totalorder %s28, 1
    %p376 = por %p374, %p375
    %p377 = scmp.ne.s32.totalorder %s366, %s367
    %p378 = scmp.eq.s32.totalorder %s28, 0
    %p379 = por %p377, %p378
    %p380 = scmp.ne.s32.totalorder %s366, %s367
    %p381 = scmp.eq.s32.totalorder %s29, 1
    %p382 = por %p380, %p381
    %p384 = scmp.ne.s32.totalorder %s367, %s383
    %p385 = scmp.eq.s32.totalorder %s29, 0
    %p386 = por %p384, %p385
    %s387 = ssub.s32 %s23, %s30
    %p388 = scmp.eq.s32.totalorder %s387, 0
    %s390 = sadd.s32 %s389, 1
    %s391 = scalar_select %p388, %s389, %s390
    %p394 = pneg %p388
    %p395 = scmp.eq.s32.totalorder %s23, 1
    %p396 = por %p394, %p395
    %p397 = scmp.ne.s32.totalorder %s389, %s392
    %p398 = scmp.eq.s32.totalorder %s23, 0
    %p399 = por %p397, %p398
    %p400 = scmp.ne.s32.totalorder %s389, %s392
    %p401 = scmp.eq.s32.totalorder %s28, 1
    %p402 = por %p400, %p401
    %p403 = scmp.ne.s32.totalorder %s392, %s393
    %p404 = scmp.eq.s32.totalorder %s28, 0
    %p405 = por %p403, %p404
    %p406 = scmp.ne.s32.totalorder %s392, %s393
    %p407 = scmp.eq.s32.totalorder %s29, 1
    %p408 = por %p406, %p407
    %p410 = scmp.ne.s32.totalorder %s393, %s409
    %p411 = scmp.eq.s32.totalorder %s29, 0
    %p412 = por %p410, %p411
    %p413 = scmp.le.s32.totalorder 1, %s23
    %p414 = scmp.lt.s32.totalorder %s23, 3
    %p415 = pnand %p413, %p414
    %p416 = pneg %p415
    // Predicated region
    $region9: #{scvae_batch_forward.2} parent=5 // pred_check
      _
    $region10: #{scvae_batch_forward.2} parent=5 // pred_check_branch
      %418 = sbr.rel (%p415) target = $region12
    $region11: #{scvae_batch_forward.2} parent=5 // pred_region
      %s419 = ssub.s32 %s23, 1
      // Predicated region
      $region13: #{scvae_batch_forward.2} parent=11 // pred_check
        %p420 = pneg %p122
      $region14: #{scvae_batch_forward.2} parent=11 // pred_check_branch
        %422 = sbr.rel (%p420) target = $region16
      $region15: #{scvae_batch_forward.2} parent=11 // pred_region
        _
      $region16: #{scvae_batch_forward.2} parent=11 // pred_fallthru
        _
      // Predicated region
      $region17: #{scvae_batch_forward.2} parent=11 // pred_check
        %p423 = pneg %p143
      $region18: #{scvae_batch_forward.2} parent=11 // pred_check_branch
        %425 = sbr.rel (%p423) target = $region20
      $region19: #{scvae_batch_forward.2} parent=11 // pred_region
        _
      $region20: #{scvae_batch_forward.2} parent=11 // pred_fallthru
        _
      // Predicated region
      $region21: #{scvae_batch_forward.2} parent=11 // pred_check
        %p426 = pneg %p164
      $region22: #{scvae_batch_forward.2} parent=11 // pred_check_branch
        %428 = sbr.rel (%p426) target = $region24
      $region23: #{scvae_batch_forward.2} parent=11 // pred_region
        _
      $region24: #{scvae_batch_forward.2} parent=11 // pred_fallthru
        _
      // Predicated region
      $region25: #{scvae_batch_forward.2} parent=11 // pred_check
        %p429 = pneg %p185
      $region26: #{scvae_batch_forward.2} parent=11 // pred_check_branch
        %431 = sbr.rel (%p429) target = $region28
      $region27: #{scvae_batch_forward.2} parent=11 // pred_region
        _
      $region28: #{scvae_batch_forward.2} parent=11 // pred_fallthru
        _
      // Predicated region
      $region29: #{scvae_batch_forward.2} parent=11 // pred_check
        %p432 = pneg %p206
      $region30: #{scvae_batch_forward.2} parent=11 // pred_check_branch
        %434 = sbr.rel (%p432) target = $region32
      $region31: #{scvae_batch_forward.2} parent=11 // pred_region
        _
      $region32: #{scvae_batch_forward.2} parent=11 // pred_fallthru
        _
      // Predicated region
      $region33: #{scvae_batch_forward.2} parent=11 // pred_check
        %p435 = pneg %p227
      $region34: #{scvae_batch_forward.2} parent=11 // pred_check_branch
        %437 = sbr.rel (%p435) target = $region36
      $region35: #{scvae_batch_forward.2} parent=11 // pred_region
        _
      $region36: #{scvae_batch_forward.2} parent=11 // pred_fallthru
        _
      // Predicated region
      $region37: #{scvae_batch_forward.2} parent=11 // pred_check
        %p438 = pneg %p248
      $region38: #{scvae_batch_forward.2} parent=11 // pred_check_branch
        %440 = sbr.rel (%p438) target = $region40
      $region39: #{scvae_batch_forward.2} parent=11 // pred_region
        _
      $region40: #{scvae_batch_forward.2} parent=11 // pred_fallthru
        _
      // Predicated region
      $region41: #{scvae_batch_forward.2} parent=11 // pred_check
        %p441 = pneg %p269
      $region42: #{scvae_batch_forward.2} parent=11 // pred_check_branch
        %443 = sbr.rel (%p441) target = $region44
      $region43: #{scvae_batch_forward.2} parent=11 // pred_region
        _
      $region44: #{scvae_batch_forward.2} parent=11 // pred_fallthru
        _
      // Predicated region
      $region45: #{scvae_batch_forward.2} parent=11 // pred_check
        %p444 = pneg %p290
      $region46: #{scvae_batch_forward.2} parent=11 // pred_check_branch
        %446 = sbr.rel (%p444) target = $region48
      $region47: #{scvae_batch_forward.2} parent=11 // pred_region
        _
      $region48: #{scvae_batch_forward.2} parent=11 // pred_fallthru
        _
      // Predicated region
      $region49: #{scvae_batch_forward.2} parent=11 // pred_check
        %p447 = pneg %p311
      $region50: #{scvae_batch_forward.2} parent=11 // pred_check_branch
        %449 = sbr.rel (%p447) target = $region52
      $region51: #{scvae_batch_forward.2} parent=11 // pred_region
        _
      $region52: #{scvae_batch_forward.2} parent=11 // pred_fallthru
        _
      // Predicated region
      $region53: #{scvae_batch_forward.2} parent=11 // pred_check
        %p450 = pneg %p332
      $region54: #{scvae_batch_forward.2} parent=11 // pred_check_branch
        %452 = sbr.rel (%p450) target = $region56
      $region55: #{scvae_batch_forward.2} parent=11 // pred_region
        _
      $region56: #{scvae_batch_forward.2} parent=11 // pred_fallthru
        _
      // Predicated region
      $region57: #{scvae_batch_forward.2} parent=11 // pred_check
        %p453 = pneg %p353
      $region58: #{scvae_batch_forward.2} parent=11 // pred_check_branch
        %455 = sbr.rel (%p453) target = $region60
      $region59: #{scvae_batch_forward.2} parent=11 // pred_region
        _
      $region60: #{scvae_batch_forward.2} parent=11 // pred_fallthru
        _
    $region12: #{scvae_batch_forward.2} parent=5 // pred_fallthru
      _
    %p456 = scmp.lt.s32.totalorder %s23, 2
    // Predicated region
    $region61: #{scvae_batch_forward.2} parent=5 // pred_check
      %p457 = pneg %p456
    $region62: #{scvae_batch_forward.2} parent=5 // pred_check_branch
      %459 = sbr.rel (%p457) target = $region64
    $region63: #{scvae_batch_forward.2} parent=5 // pred_region
      // Predicated region
      $region65: #{scvae_batch_forward.2} parent=63 // pred_check
        %p460 = pneg %p43
      $region66: #{scvae_batch_forward.2} parent=63 // pred_check_branch
        %462 = sbr.rel (%p460) target = $region68
      $region67: #{scvae_batch_forward.2} parent=63 // pred_region
        %p463 = scmp.lt.s32.totalorder %s23, 1
        %s464 = scalar_select %p463, %s23, 1
        %s465 = smul.addr %s464, 2
        %s466 = smul.addr %s465, 8
        %s467 = scalar_lea.vmem %s0, %s466
      $region68: #{scvae_batch_forward.2} parent=63 // pred_fallthru
        _
      // Predicated region
      $region69: #{scvae_batch_forward.2} parent=63 // pred_check
        %p468 = pneg %p69
      $region70: #{scvae_batch_forward.2} parent=63 // pred_check_branch
        %470 = sbr.rel (%p468) target = $region72
      $region71: #{scvae_batch_forward.2} parent=63 // pred_region
        %p471 = scmp.lt.s32.totalorder %s23, 1
        %s472 = scalar_select %p471, %s23, 1
        %s473 = smul.addr %s472, 8
        %s474 = scalar_lea.vmem %s1, %s473
      $region72: #{scvae_batch_forward.2} parent=63 // pred_fallthru
        _
      // Predicated region
      $region73: #{scvae_batch_forward.2} parent=63 // pred_check
        %p475 = pneg %p95
      $region74: #{scvae_batch_forward.2} parent=63 // pred_check_branch
        %477 = sbr.rel (%p475) target = $region76
      $region75: #{scvae_batch_forward.2} parent=63 // pred_region
        %p478 = scmp.lt.s32.totalorder %s23, 1
        %s479 = scalar_select %p478, %s23, 1
        %s480 = smul.addr %s479, 8
        %s481 = scalar_lea.vmem %s2, %s480
      $region76: #{scvae_batch_forward.2} parent=63 // pred_fallthru
        _
    $region64: #{scvae_batch_forward.2} parent=5 // pred_fallthru
      _
    %p482 = scmp.le.s32.totalorder 1, %s23
    %p483 = scmp.lt.s32.totalorder %s23, 3
    %p484 = pnand %p482, %p483
    %p485 = pneg %p484
    // Predicated region
    $region77: #{scvae_batch_forward.2} parent=5 // pred_check
      _
    $region78: #{scvae_batch_forward.2} parent=5 // pred_check_branch
      %487 = sbr.rel (%p484) target = $region80
    $region79: #{scvae_batch_forward.2} parent=5 // pred_region
      %s488 = ssub.s32 %s23, 1
      %p489 = scmp.lt.s32.totalorder %s28, 1
      %s490 = scalar_select %p489, %s28, 1
      %s491 = smul.addr %s490, 2
      %s492 = smul.addr %s491, 8
      %s493 = scalar_lea.vmem %s0, %s492
      %p494 = pneg %p49
      %p495 = pneg %p46
      %p496 = scmp.lt.s32.totalorder %s28, 1
      %s497 = scalar_select %p496, %s28, 1
      %s498 = smul.addr %s497, 8
      %s499 = scalar_lea.vmem %s1, %s498
      %p500 = pneg %p75
      %p501 = pneg %p72
      %p502 = scmp.lt.s32.totalorder %s28, 1
      %s503 = scalar_select %p502, %s28, 1
      %s504 = smul.addr %s503, 8
      %s505 = scalar_lea.vmem %s2, %s504
      %p506 = pneg %p101
      %p507 = pneg %p98
      %p508 = pneg %p122
      %p509 = pneg %p119
      %p510 = pneg %p143
      %p511 = pneg %p140
      %p512 = pneg %p164
      %p513 = pneg %p161
      %p514 = pneg %p185
      %p515 = pneg %p182
      %p516 = pneg %p206
      %p517 = pneg %p203
      %p518 = pneg %p227
      %p519 = pneg %p224
      %p520 = pneg %p248
      %p521 = pneg %p245
      %p522 = pneg %p269
      %p523 = pneg %p266
      %p524 = pneg %p290
      %p525 = pneg %p287
      %p526 = pneg %p311
      %p527 = pneg %p308
      %p528 = pneg %p332
      %p529 = pneg %p329
      %p530 = pneg %p353
      %p531 = pneg %p350
      %p532 = pneg %p379
      %p533 = pneg %p376
      %p534 = scmp.lt.s32.totalorder %s28, 1
      %s535 = scalar_select %p534, %s28, 1
      %s536 = smul.addr %s535, 8
      %s537 = scalar_lea.vmem %s15, %s536
      %p538 = pneg %p405
      %p539 = pneg %p402
      %p540 = scmp.lt.s32.totalorder %s28, 1
      %s541 = scalar_select %p540, %s28, 1
      %s542 = smul.addr %s541, 4
      %s543 = scalar_lea.vmem %s16, %s542
      %p544 = scmp.lt.s32.totalorder %s28, 1
      %s545 = scalar_select %p544, %s28, 1
      %s546 = smul.addr %s545, 2
      %s547 = smul.addr %s546, 8
      %s548 = scalar_lea.vmem %s0, %s547
      %p549 = scmp.lt.s32.totalorder %s28, 1
      %s550 = scalar_select %p549, %s28, 1
      %s551 = smul.addr %s550, 8
      %s552 = scalar_lea.vmem %s1, %s551
      %p553 = scmp.lt.s32.totalorder %s28, 1
      %s554 = scalar_select %p553, %s28, 1
      %s555 = smul.addr %s554, 8
      %s556 = scalar_lea.vmem %s2, %s555
      %p557 = scmp.lt.s32.totalorder %s28, 1
      %s558 = scalar_select %p557, %s28, 1
      %s559 = smul.addr %s558, 8
      %s560 = scalar_lea.vmem %s15, %s559
      %p561 = scmp.lt.s32.totalorder %s28, 1
      %s562 = scalar_select %p561, %s28, 1
      %s563 = smul.addr %s562, 4
      %s564 = scalar_lea.vmem %s16, %s563
      %v566 = vld [vmem:[%s548] sm:$0xff]
      %v567 = vld [vmem:[%s548 + $0x8] sm:$0xff]
      %v568 = vld [vmem:[%s552] sm:$0xff]
      %v569 = vld [vmem:[%s3] sm:$0xf]
      %v570 = vld [vmem:[%s3 + $0x4] sm:$0xf]
      %v571 = vld [vmem:[%s3 + $0x8] sm:$0xf]
      %v572 = vld [vmem:[%s3 + $0xc] sm:$0xf]
      %v573 = vld [vmem:[%s3 + $0x10] sm:$0xf]
      %v574 = vld [vmem:[%s3 + $0x14] sm:$0xf]
      %v575 = vld [vmem:[%s3 + $0x18] sm:$0xf]
      %v576 = vld [vmem:[%s3 + $0x1c] sm:$0xf]
      %v577 = vld [vmem:[%s3 + $0x20] sm:$0xf]
      %v578 = vld [vmem:[%s3 + $0x24] sm:$0xf]
      %v579 = vld [vmem:[%s3 + $0x28] sm:$0xf]
      %v580 = vld [vmem:[%s3 + $0x2c] sm:$0xf]
      %v581 = vld [vmem:[%s3 + $0x30] sm:$0xf]
      %v582 = vld [vmem:[%s3 + $0x34] sm:$0xf]
      %v583 = vld [vmem:[%s3 + $0x38] sm:$0xf]
      %v584 = vld [vmem:[%s3 + $0x3c] sm:$0xf]
      %v585 = vld [vmem:[%s3 + $0x40] sm:$0xf]
      %v586 = vld [vmem:[%s3 + $0x44] sm:$0xf]
      %v587 = vld [vmem:[%s3 + $0x48] sm:$0xf]
      %v588 = vld [vmem:[%s3 + $0x4c] sm:$0xf]
      %v589 = vld [vmem:[%s3 + $0x50] sm:$0xf]
      %v590 = vld [vmem:[%s3 + $0x54] sm:$0xf]
      %v591 = vld [vmem:[%s3 + $0x58] sm:$0xf]
      %v592 = vld [vmem:[%s3 + $0x5c] sm:$0xf]
      %v593 = vld [vmem:[%s3 + $0x60] sm:$0xf]
      %v594 = vld [vmem:[%s3 + $0x64] sm:$0xf]
      %v595 = vld [vmem:[%s3 + $0x68] sm:$0xf]
      %v596 = vld [vmem:[%s3 + $0x6c] sm:$0xf]
      %v597 = vld [vmem:[%s3 + $0x70] sm:$0xf]
      %v598 = vld [vmem:[%s3 + $0x74] sm:$0xf]
      %v599 = vld [vmem:[%s3 + $0x78] sm:$0xf]
      %v600 = vld [vmem:[%s3 + $0x7c] sm:$0xf]
      %v601 = vpack.c.bf16 %v566, %v566
      %v602 = vpack.c.bf16 %v567, %v567
      %v603 = vld [vmem:[%s4] sm:$0x3]
      %v604 = vpack.c.bf16 %v568, %v568
      %vm605 = vcmask 31744
      %v607 = vsel %vm605, %v604, 0
      %vm609 = vcmask 1041408
      %v611 = vsel %vm609, %v603, 0
      %613 = vmatprep.subr.bf16.mxu0 0
      %614 = vmatpush1.bf16.msra.mxu0 0
      %615 = vmatprep.subr.bf16.mxu0 0
      %616 = vmatpush1.bf16.msra.mxu0 0
      %617 = vmatprep.subr.bf16.mxu0 0
      %618 = vmatpush1.bf16.msra.mxu0 0
      %619 = vmatprep.subr.bf16.mxu0 0
      %620 = vmatpush1.bf16.msra.mxu0 0
      %621 = vmatprep.subr.bf16.mxu0 0
      %622 = vmatpush1.bf16.msra.mxu0 0
      %623 = vmatprep.subr.bf16.mxu0 0
      %624 = vmatpush1.bf16.msra.mxu0 0
      %625 = vmatprep.subr.bf16.mxu0 0
      %626 = vmatpush1.bf16.msra.mxu0 0
      %627 = vmatprep.subr.bf16.mxu0 0
      %628 = vmatpush1.bf16.msra.mxu0 %v611
      %629 = vmatprep.subr.bf16.mxu0 0
      %630 = vmatpush2.bf16.msra.mxu0 0
      %631 = vmatprep.subr.bf16.mxu0 0
      %632 = vmatpush2.bf16.msra.mxu0 0
      %633 = vmatprep.subr.bf16.mxu0 0
      %634 = vmatpush2.bf16.msra.mxu0 0
      %635 = vmatprep.subr.bf16.mxu0 0
      %636 = vmatpush2.bf16.msra.mxu0 0
      %637 = vmatprep.subr.bf16.mxu0 0
      %638 = vmatpush2.bf16.msra.mxu0 0
      %639 = vmatprep.subr.bf16.mxu0 0
      %640 = vmatpush2.bf16.msra.mxu0 0
      %641 = vmatprep.subr.bf16.mxu0 0
      %642 = vmatpush2.bf16.msra.mxu0 0
      %643 = vmatprep.subr.bf16.mxu0 0
      %644 = vmatpush2.bf16.msra.mxu0 0
      %645 = vmatprep.mubr.bf16.mxu0 0
      %646 = vmatmul.mubr.bf16.gmra.mxu0 %v607
      %v647 = vpop.f32.mrf.mxu0
      %v648 = vadd.f32 0.0, %v647
      %v649 = vpop.f32.mrf.mxu0
      %v650 = vpop.f32.mrf.mxu0
      %v651 = vpop.f32.mrf.mxu0
      %652 = vdwg.mxu0
      %v685 = vunpack.c.l.b16 %v569
      %v686 = vunpack.c.l.b16 %v570
      %v687 = vunpack.c.l.b16 %v571
      %v688 = vunpack.c.l.b16 %v572
      %v689 = vunpack.c.l.b16 %v573
      %v690 = vunpack.c.l.b16 %v574
      %v691 = vunpack.c.l.b16 %v575
      %v692 = vunpack.c.l.b16 %v576
      %v693 = vunpack.c.l.b16 %v577
      %v694 = vunpack.c.l.b16 %v578
      %v695 = vunpack.c.l.b16 %v579
      %v696 = vunpack.c.l.b16 %v580
      %v697 = vunpack.c.l.b16 %v581
      %v698 = vunpack.c.l.b16 %v582
      %v699 = vunpack.c.l.b16 %v583
      %v700 = vunpack.c.l.b16 %v584
      %v701 = vunpack.c.l.b16 %v585
      %v702 = vunpack.c.l.b16 %v586
      %v703 = vunpack.c.l.b16 %v587
      %v704 = vunpack.c.l.b16 %v588
      %v705 = vunpack.c.l.b16 %v589
      %v706 = vunpack.c.l.b16 %v590
      %v707 = vunpack.c.l.b16 %v591
      %v708 = vunpack.c.l.b16 %v592
      %v709 = vunpack.c.l.b16 %v593
      %v710 = vunpack.c.l.b16 %v594
      %v711 = vunpack.c.l.b16 %v595
      %v712 = vunpack.c.l.b16 %v596
      %v713 = vunpack.c.l.b16 %v597
      %v714 = vunpack.c.l.b16 %v598
      %v715 = vunpack.c.l.b16 %v599
      %v716 = vunpack.c.l.b16 %v600
      %v717 = vpack.c.b16 %v686, %v685
      %v718 = vpack.c.b16 %v688, %v687
      %v719 = vpack.c.b16 %v690, %v689
      %v720 = vpack.c.b16 %v692, %v691
      %v721 = vpack.c.b16 %v694, %v693
      %v722 = vpack.c.b16 %v696, %v695
      %v723 = vpack.c.b16 %v698, %v697
      %v724 = vpack.c.b16 %v700, %v699
      %v725 = vpack.c.b16 %v702, %v701
      %v726 = vpack.c.b16 %v704, %v703
      %v727 = vpack.c.b16 %v706, %v705
      %v728 = vpack.c.b16 %v708, %v707
      %v729 = vpack.c.b16 %v710, %v709
      %v730 = vpack.c.b16 %v712, %v711
      %v731 = vpack.c.b16 %v714, %v713
      %v732 = vpack.c.b16 %v716, %v715
      %749 = vmatprep.subr.bf16.mxu0 0
      %750 = vmatpush1.bf16.msra.mxu0 %v724
      %751 = vmatprep.subr.bf16.mxu0 0
      %752 = vmatpush1.bf16.msra.mxu0 %v723
      %753 = vmatprep.subr.bf16.mxu0 0
      %754 = vmatpush1.bf16.msra.mxu0 %v722
      %755 = vmatprep.subr.bf16.mxu0 0
      %756 = vmatpush1.bf16.msra.mxu0 %v721
      %757 = vmatprep.subr.bf16.mxu0 0
      %758 = vmatpush1.bf16.msra.mxu0 %v720
      %759 = vmatprep.subr.bf16.mxu0 0
      %760 = vmatpush1.bf16.msra.mxu0 %v719
      %761 = vmatprep.subr.bf16.mxu0 0
      %762 = vmatpush1.bf16.msra.mxu0 %v718
      %763 = vmatprep.subr.bf16.mxu0 0
      %764 = vmatpush1.bf16.msra.mxu0 %v717
      %765 = vmatprep.subr.bf16.mxu0 0
      %766 = vmatpush2.bf16.msra.mxu0 %v732
      %767 = vmatprep.subr.bf16.mxu0 0
      %768 = vmatpush2.bf16.msra.mxu0 %v731
      %769 = vmatprep.subr.bf16.mxu0 0
      %770 = vmatpush2.bf16.msra.mxu0 %v730
      %771 = vmatprep.subr.bf16.mxu0 0
      %772 = vmatpush2.bf16.msra.mxu0 %v729
      %773 = vmatprep.subr.bf16.mxu0 0
      %774 = vmatpush2.bf16.msra.mxu0 %v728
      %775 = vmatprep.subr.bf16.mxu0 0
      %776 = vmatpush2.bf16.msra.mxu0 %v727
      %777 = vmatprep.subr.bf16.mxu0 0
      %778 = vmatpush2.bf16.msra.mxu0 %v726
      %779 = vmatprep.subr.bf16.mxu0 0
      %780 = vmatpush2.bf16.msra.mxu0 %v725
      %781 = vmatprep.mubr.bf16.mxu0 %v602
      %782 = vmatmul.mubr.bf16.gmra.mxu0 %v601
      %v783 = vpop.f32.mrf.mxu0
      %v784 = vadd.f32 %v648, %v783
      %v785 = vpop.f32.mrf.mxu0
      %v786 = vpop.f32.mrf.mxu0
      %v787 = vpop.f32.mrf.mxu0
      %788 = vdwg.mxu0
      %v789 = vld [vmem:[%s5] sm:$0x1]
      %v791 = vlaneseq
      %v792 = vshrl.u32 %v791, 7
      %v793 = vsub.s32 0, %v792
      %v794 = vrot.slane %v789, %v793
      %v796 = vadd.f32 %v784, %v794
      %vm797 = vcmask 261120
      %v798 = vsel %vm797, %v796, 0.0
      %799 = vadd.xlane.f32.xlu0 %v798
      %v800 = vpop.xlane.xlu0 %799
      %v801 = vmul.f32 %v800, 0.03125
      %v802 = vsub.f32 %v796, %v801
      %v803 = vmul.f32 %v802, %v802
      %v804 = vsel %vm797, %v803, 0.0
      %805 = vadd.xlane.f32.xlu0 %v804
      %v806 = vpop.xlane.xlu0 %805
      %v807 = vmul.f32 %v806, 0.03125
      %v808 = vadd.f32 %v807, 1e-05
      %v809 = vrsqrt.pop %v808
      %v810 = vmul.f32 %v802, %v809
      %v811 = vmax.f32 %v810, 0.0
      %v812 = vld [vmem:[%s6] sm:$0xf]
      %v813 = vld [vmem:[%s6 + $0x4] sm:$0xf]
      %v814 = vld [vmem:[%s6 + $0x8] sm:$0xf]
      %v815 = vld [vmem:[%s6 + $0xc] sm:$0xf]
      %v816 = vpack.c.bf16 %v811, %v811
      %v817 = vld [vmem:[%s7] sm:$0x1]
      %v819 = vlaneseq
      %v820 = vshrl.u32 %v819, 7
      %v821 = vsub.s32 0, %v820
      %v822 = vrot.slane %v817, %v821
      %v828 = vunpack.c.l.b16 %v812
      %v829 = vunpack.c.l.b16 %v813
      %v830 = vunpack.c.l.b16 %v814
      %v831 = vunpack.c.l.b16 %v815
      %v832 = vpack.c.b16 %v829, %v828
      %v833 = vpack.c.b16 %v831, %v830
      %v837 = vsel %vm797, %v816, 0
      %839 = vmatprep.subr.bf16.mxu0 0
      %840 = vmatpush1.bf16.msra.mxu0 0
      %841 = vmatprep.subr.bf16.mxu0 0
      %842 = vmatpush1.bf16.msra.mxu0 0
      %843 = vmatprep.subr.bf16.mxu0 0
      %844 = vmatpush1.bf16.msra.mxu0 0
      %845 = vmatprep.subr.bf16.mxu0 0
      %846 = vmatpush1.bf16.msra.mxu0 0
      %847 = vmatprep.subr.bf16.mxu0 0
      %848 = vmatpush1.bf16.msra.mxu0 0
      %849 = vmatprep.subr.bf16.mxu0 0
      %850 = vmatpush1.bf16.msra.mxu0 0
      %851 = vmatprep.subr.bf16.mxu0 0
      %852 = vmatpush1.bf16.msra.mxu0 %v833
      %853 = vmatprep.subr.bf16.mxu0 0
      %854 = vmatpush1.bf16.msra.mxu0 %v832
      %855 = vmatprep.subr.bf16.mxu0 0
      %856 = vmatpush2.bf16.msra.mxu0 0
      %857 = vmatprep.subr.bf16.mxu0 0
      %858 = vmatpush2.bf16.msra.mxu0 0
      %859 = vmatprep.subr.bf16.mxu0 0
      %860 = vmatpush2.bf16.msra.mxu0 0
      %861 = vmatprep.subr.bf16.mxu0 0
      %862 = vmatpush2.bf16.msra.mxu0 0
      %863 = vmatprep.subr.bf16.mxu0 0
      %864 = vmatpush2.bf16.msra.mxu0 0
      %865 = vmatprep.subr.bf16.mxu0 0
      %866 = vmatpush2.bf16.msra.mxu0 0
      %867 = vmatprep.subr.bf16.mxu0 0
      %868 = vmatpush2.bf16.msra.mxu0 0
      %869 = vmatprep.subr.bf16.mxu0 0
      %870 = vmatpush2.bf16.msra.mxu0 0
      %871 = vmatprep.mubr.bf16.mxu0 0
      %872 = vmatmul.mubr.bf16.gmra.mxu0 %v837
      %v873 = vpop.f32.mrf.mxu0
      %v874 = vadd.f32 %v822, %v873
      %v875 = vpop.f32.mrf.mxu0
      %v876 = vpop.f32.mrf.mxu0
      %v877 = vpop.f32.mrf.mxu0
      %878 = vdwg.mxu0
      %v879 = vsel %vm797, %v874, 0.0
      %880 = vadd.xlane.f32.xlu0 %v879
      %v881 = vpop.xlane.xlu0 %880
      %v882 = vmul.f32 %v881, 0.03125
      %v883 = vsub.f32 %v874, %v882
      %v884 = vmul.f32 %v883, %v883
      %v885 = vsel %vm797, %v884, 0.0
      %886 = vadd.xlane.f32.xlu0 %v885
      %v887 = vpop.xlane.xlu0 %886
      %v888 = vmul.f32 %v887, 0.03125
      %v889 = vadd.f32 %v888, 1e-05
      %v890 = vrsqrt.pop %v889
      %v891 = vmul.f32 %v883, %v890
      %v892 = vmax.f32 %v891, 0.0
      %v893 = vld [vmem:[%s8] sm:$0xf]
      %v894 = vld [vmem:[%s8 + $0x4] sm:$0xf]
      %v895 = vld [vmem:[%s8 + $0x8] sm:$0xf]
      %v896 = vld [vmem:[%s8 + $0xc] sm:$0xf]
      %v897 = vpack.c.bf16 %v892, %v892
      %v898 = vld [vmem:[%s9] sm:$0x1]
      %v900 = vlaneseq
      %v901 = vshrl.u32 %v900, 7
      %v902 = vsub.s32 0, %v901
      %v903 = vrot.slane %v898, %v902
      %v909 = vunpack.c.l.b16 %v893
      %v910 = vunpack.c.l.b16 %v894
      %v911 = vunpack.c.l.b16 %v895
      %v912 = vunpack.c.l.b16 %v896
      %v913 = vpack.c.b16 %v910, %v909
      %v914 = vpack.c.b16 %v912, %v911
      %v918 = vsel %vm797, %v897, 0
      %920 = vmatprep.subr.bf16.mxu0 0
      %921 = vmatpush1.bf16.msra.mxu0 0
      %922 = vmatprep.subr.bf16.mxu0 0
      %923 = vmatpush1.bf16.msra.mxu0 0
      %924 = vmatprep.subr.bf16.mxu0 0
      %925 = vmatpush1.bf16.msra.mxu0 0
      %926 = vmatprep.subr.bf16.mxu0 0
      %927 = vmatpush1.bf16.msra.mxu0 0
      %928 = vmatprep.subr.bf16.mxu0 0
      %929 = vmatpush1.bf16.msra.mxu0 0
      %930 = vmatprep.subr.bf16.mxu0 0
      %931 = vmatpush1.bf16.msra.mxu0 0
      %932 = vmatprep.subr.bf16.mxu0 0
      %933 = vmatpush1.bf16.msra.mxu0 %v914
      %934 = vmatprep.subr.bf16.mxu0 0
      %935 = vmatpush1.bf16.msra.mxu0 %v913
      %936 = vmatprep.subr.bf16.mxu0 0
      %937 = vmatpush2.bf16.msra.mxu0 0
      %938 = vmatprep.subr.bf16.mxu0 0
      %939 = vmatpush2.bf16.msra.mxu0 0
      %940 = vmatprep.subr.bf16.mxu0 0
      %941 = vmatpush2.bf16.msra.mxu0 0
      %942 = vmatprep.subr.bf16.mxu0 0
      %943 = vmatpush2.bf16.msra.mxu0 0
      %944 = vmatprep.subr.bf16.mxu0 0
      %945 = vmatpush2.bf16.msra.mxu0 0
      %946 = vmatprep.subr.bf16.mxu0 0
      %947 = vmatpush2.bf16.msra.mxu0 0
      %948 = vmatprep.subr.bf16.mxu0 0
      %949 = vmatpush2.bf16.msra.mxu0 0
      %950 = vmatprep.subr.bf16.mxu0 0
      %951 = vmatpush2.bf16.msra.mxu0 0
      %952 = vmatprep.mubr.bf16.mxu0 0
      %953 = vmatmul.mubr.bf16.gmra.mxu0 %v918
      %v954 = vpop.f32.mrf.mxu0
      %v955 = vadd.f32 %v903, %v954
      %v956 = vpop.f32.mrf.mxu0
      %v957 = vpop.f32.mrf.mxu0
      %v958 = vpop.f32.mrf.mxu0
      %959 = vdwg.mxu0
      %vm960 = vcmp.gt.f32.partialorder %v955, 20.0
      %v961 = vmin.f32 %v955, 20.0
      %v962 = vmul.f32 %v961, 1.442695
      %v963 = vpow.pop %v962
      %v964 = vadd.f32 %v963, 1.0
      %v965 = vlog2.pop %v964
      %v966 = vmul.f32 %v965, 0.6931472
      %v967 = vmul.f32 -0.5, %v963
      %v968 = vadd.f32 %v967, 1.0
      %v969 = vmul.f32 %v968, %v963
      %v970 = vand.u32 2147483647, %v963
      %vm971 = vcmp.lt.f32.partialorder %v970, 0.0004427343
      %v972 = vsel %vm971, %v969, %v966
      %v973 = vsel %vm960, %v955, %v972
      %v974 = vld [vmem:[%s556] sm:$0xff]
      %976 = vrot.lane.b32.xlu0 %v974, 8
      %v977 = vpop.permute.xlu0 %976
      %v979 = vmul.f32 %v973, %v977
      %981 = vrot.lane.b32.xlu0 %v979, 120
      %v982 = vpop.permute.xlu0 %981
      %v984 = vadd.f32 %v955, %v982
      %986 = vrot.lane.b32.xlu0 %v955, 8
      %v987 = vpop.permute.xlu0 %986
      %990 = vrot.lane.b32.xlu0 %v973, 8
      %v991 = vpop.permute.xlu0 %990
      %vm993 = vcmask 64512
      %v994 = vsel %vm993, %v984, %v987
      %vm995 = vcmask 130048
      %v996 = vsel %vm995, %v994, %v991
      %vm997 = vcmask 195584
      %998 = vst.msk [vmem:[%s560] sm:$0xff] %vm997, %v996
      %v999 = vld [vmem:[%s10] sm:$0xf]
      %v1000 = vpack.c.bf16 %v984, %v984
      %v1001 = vld [vmem:[%s11] sm:$0x3]
      %v1003 = vsel %vm609, %v1001, 0
      %1005 = vmatprep.subr.bf16.mxu0 0
      %1006 = vmatpush1.bf16.msra.mxu0 0
      %1007 = vmatprep.subr.bf16.mxu0 0
      %1008 = vmatpush1.bf16.msra.mxu0 0
      %1009 = vmatprep.subr.bf16.mxu0 0
      %1010 = vmatpush1.bf16.msra.mxu0 0
      %1011 = vmatprep.subr.bf16.mxu0 0
      %1012 = vmatpush1.bf16.msra.mxu0 0
      %1013 = vmatprep.subr.bf16.mxu0 0
      %1014 = vmatpush1.bf16.msra.mxu0 0
      %1015 = vmatprep.subr.bf16.mxu0 0
      %1016 = vmatpush1.bf16.msra.mxu0 0
      %1017 = vmatprep.subr.bf16.mxu0 0
      %1018 = vmatpush1.bf16.msra.mxu0 0
      %1019 = vmatprep.subr.bf16.mxu0 0
      %1020 = vmatpush1.bf16.msra.mxu0 %v1003
      %1021 = vmatprep.subr.bf16.mxu0 0
      %1022 = vmatpush2.bf16.msra.mxu0 0
      %1023 = vmatprep.subr.bf16.mxu0 0
      %1024 = vmatpush2.bf16.msra.mxu0 0
      %1025 = vmatprep.subr.bf16.mxu0 0
      %1026 = vmatpush2.bf16.msra.mxu0 0
      %1027 = vmatprep.subr.bf16.mxu0 0
      %1028 = vmatpush2.bf16.msra.mxu0 0
      %1029 = vmatprep.subr.bf16.mxu0 0
      %1030 = vmatpush2.bf16.msra.mxu0 0
      %1031 = vmatprep.subr.bf16.mxu0 0
      %1032 = vmatpush2.bf16.msra.mxu0 0
      %1033 = vmatprep.subr.bf16.mxu0 0
      %1034 = vmatpush2.bf16.msra.mxu0 0
      %1035 = vmatprep.subr.bf16.mxu0 0
      %1036 = vmatpush2.bf16.msra.mxu0 0
      %1037 = vmatprep.mubr.bf16.mxu0 0
      %1038 = vmatmul.mubr.bf16.gmra.mxu0 %v607
      %v1039 = vpop.f32.mrf.mxu0
      %v1040 = vadd.f32 0.0, %v1039
      %v1041 = vpop.f32.mrf.mxu0
      %v1042 = vpop.f32.mrf.mxu0
      %v1043 = vpop.f32.mrf.mxu0
      %1044 = vdwg.mxu0
      %v1046 = vsel %vm993, %v1000, 0
      %vm1048 = vcmask 1043456
      %v1050 = vsel %vm1048, %v999, 0
      %1052 = vmatprep.subr.bf16.mxu0 0
      %1053 = vmatpush1.bf16.msra.mxu0 0
      %1054 = vmatprep.subr.bf16.mxu0 0
      %1055 = vmatpush1.bf16.msra.mxu0 0
      %1056 = vmatprep.subr.bf16.mxu0 0
      %1057 = vmatpush1.bf16.msra.mxu0 0
      %1058 = vmatprep.subr.bf16.mxu0 0
      %1059 = vmatpush1.bf16.msra.mxu0 0
      %1060 = vmatprep.subr.bf16.mxu0 0
      %1061 = vmatpush1.bf16.msra.mxu0 0
      %1062 = vmatprep.subr.bf16.mxu0 0
      %1063 = vmatpush1.bf16.msra.mxu0 0
      %1064 = vmatprep.subr.bf16.mxu0 0
      %1065 = vmatpush1.bf16.msra.mxu0 0
      %1066 = vmatprep.subr.bf16.mxu0 0
      %1067 = vmatpush1.bf16.msra.mxu0 %v1050
      %1068 = vmatprep.subr.bf16.mxu0 0
      %1069 = vmatpush2.bf16.msra.mxu0 0
      %1070 = vmatprep.subr.bf16.mxu0 0
      %1071 = vmatpush2.bf16.msra.mxu0 0
      %1072 = vmatprep.subr.bf16.mxu0 0
      %1073 = vmatpush2.bf16.msra.mxu0 0
      %1074 = vmatprep.subr.bf16.mxu0 0
      %1075 = vmatpush2.bf16.msra.mxu0 0
      %1076 = vmatprep.subr.bf16.mxu0 0
      %1077 = vmatpush2.bf16.msra.mxu0 0
      %1078 = vmatprep.subr.bf16.mxu0 0
      %1079 = vmatpush2.bf16.msra.mxu0 0
      %1080 = vmatprep.subr.bf16.mxu0 0
      %1081 = vmatpush2.bf16.msra.mxu0 0
      %1082 = vmatprep.subr.bf16.mxu0 0
      %1083 = vmatpush2.bf16.msra.mxu0 0
      %1084 = vmatprep.mubr.bf16.mxu0 0
      %1085 = vmatmul.mubr.bf16.gmra.mxu0 %v1046
      %v1086 = vpop.f32.mrf.mxu0
      %v1087 = vadd.f32 %v1040, %v1086
      %v1088 = vpop.f32.mrf.mxu0
      %v1089 = vpop.f32.mrf.mxu0
      %v1090 = vpop.f32.mrf.mxu0
      %1091 = vdwg.mxu0
      %v1092 = vld [vmem:[%s12] sm:$0x1]
      %v1094 = vlaneseq
      %v1095 = vshrl.u32 %v1094, 7
      %v1096 = vsub.s32 0, %v1095
      %v1097 = vrot.slane %v1092, %v1096
      %v1099 = vadd.f32 %v1087, %v1097
      %v1100 = vsel %vm797, %v1099, 0.0
      %1101 = vadd.xlane.f32.xlu0 %v1100
      %v1102 = vpop.xlane.xlu0 %1101
      %v1103 = vmul.f32 %v1102, 0.03125
      %v1104 = vsub.f32 %v1099, %v1103
      %v1105 = vmul.f32 %v1104, %v1104
      %v1106 = vsel %vm797, %v1105, 0.0
      %1107 = vadd.xlane.f32.xlu0 %v1106
      %v1108 = vpop.xlane.xlu0 %1107
      %v1109 = vmul.f32 %v1108, 0.03125
      %v1110 = vadd.f32 %v1109, 1e-05
      %v1111 = vrsqrt.pop %v1110
      %v1112 = vmul.f32 %v1104, %v1111
      %v1113 = vmax.f32 %v1112, 0.0
      %v1114 = vld [vmem:[%s13] sm:$0xf]
      %v1115 = vld [vmem:[%s13 + $0x4] sm:$0xf]
      %v1116 = vld [vmem:[%s13 + $0x8] sm:$0xf]
      %v1117 = vld [vmem:[%s13 + $0xc] sm:$0xf]
      %v1118 = vpack.c.bf16 %v1113, %v1113
      %v1119 = vld [vmem:[%s14] sm:$0x1]
      %v1121 = vlaneseq
      %v1122 = vshrl.u32 %v1121, 7
      %v1123 = vsub.s32 0, %v1122
      %v1124 = vrot.slane %v1119, %v1123
      %v1130 = vunpack.c.l.b16 %v1114
      %v1131 = vunpack.c.l.b16 %v1115
      %v1132 = vunpack.c.l.b16 %v1116
      %v1133 = vunpack.c.l.b16 %v1117
      %v1134 = vpack.c.b16 %v1131, %v1130
      %v1135 = vpack.c.b16 %v1133, %v1132
      %v1139 = vsel %vm797, %v1118, 0
      %1141 = vmatprep.subr.bf16.mxu0 0
      %1142 = vmatpush1.bf16.msra.mxu0 0
      %1143 = vmatprep.subr.bf16.mxu0 0
      %1144 = vmatpush1.bf16.msra.mxu0 0
      %1145 = vmatprep.subr.bf16.mxu0 0
      %1146 = vmatpush1.bf16.msra.mxu0 0
      %1147 = vmatprep.subr.bf16.mxu0 0
      %1148 = vmatpush1.bf16.msra.mxu0 0
      %1149 = vmatprep.subr.bf16.mxu0 0
      %1150 = vmatpush1.bf16.msra.mxu0 0
      %1151 = vmatprep.subr.bf16.mxu0 0
      %1152 = vmatpush1.bf16.msra.mxu0 0
      %1153 = vmatprep.subr.bf16.mxu0 0
      %1154 = vmatpush1.bf16.msra.mxu0 %v1135
      %1155 = vmatprep.subr.bf16.mxu0 0
      %1156 = vmatpush1.bf16.msra.mxu0 %v1134
      %1157 = vmatprep.subr.bf16.mxu0 0
      %1158 = vmatpush2.bf16.msra.mxu0 0
      %1159 = vmatprep.subr.bf16.mxu0 0
      %1160 = vmatpush2.bf16.msra.mxu0 0
      %1161 = vmatprep.subr.bf16.mxu0 0
      %1162 = vmatpush2.bf16.msra.mxu0 0
      %1163 = vmatprep.subr.bf16.mxu0 0
      %1164 = vmatpush2.bf16.msra.mxu0 0
      %1165 = vmatprep.subr.bf16.mxu0 0
      %1166 = vmatpush2.bf16.msra.mxu0 0
      %1167 = vmatprep.subr.bf16.mxu0 0
      %1168 = vmatpush2.bf16.msra.mxu0 0
      %1169 = vmatprep.subr.bf16.mxu0 0
      %1170 = vmatpush2.bf16.msra.mxu0 0
      %1171 = vmatprep.subr.bf16.mxu0 0
      %1172 = vmatpush2.bf16.msra.mxu0 0
      %1173 = vmatprep.mubr.bf16.mxu0 0
      %1174 = vmatmul.mubr.bf16.gmra.mxu0 %v1139
      %v1175 = vpop.f32.mrf.mxu0
      %v1176 = vadd.f32 %v1124, %v1175
      %v1177 = vpop.f32.mrf.mxu0
      %v1178 = vpop.f32.mrf.mxu0
      %v1179 = vpop.f32.mrf.mxu0
      %1180 = vdwg.mxu0
      %v1181 = vsel %vm797, %v1176, 0.0
      %1182 = vadd.xlane.f32.xlu0 %v1181
      %v1183 = vpop.xlane.xlu0 %1182
      %v1184 = vmul.f32 %v1183, 0.03125
      %v1185 = vsub.f32 %v1176, %v1184
      %v1186 = vmul.f32 %v1185, %v1185
      %v1187 = vsel %vm797, %v1186, 0.0
      %1188 = vadd.xlane.f32.xlu0 %v1187
      %v1189 = vpop.xlane.xlu0 %1188
      %v1190 = vmul.f32 %v1189, 0.03125
      %v1191 = vadd.f32 %v1190, 1e-05
      %v1192 = vrsqrt.pop %v1191
      %v1193 = vmul.f32 %v1185, %v1192
      %v1194 = vmax.f32 %v1193, 0.0
      %v1195 = vpack.c.bf16 %v1194, %v1194
      %vm1196 = vcmask 257024
      %1197 = vst.msk [vmem:[%s564] sm:$0xf] %vm1196, %v1195
      %p1198 = scmp.lt.s32.totalorder %s28, 1
      %s1199 = scalar_select %p1198, %s28, 1
      %s1200 = smul.addr %s1199, 8
      %s1201 = scalar_lea.vmem %s15, %s1200
      %p1202 = scmp.lt.s32.totalorder %s28, 1
      %s1203 = scalar_select %p1202, %s28, 1
      %s1204 = smul.addr %s1203, 4
      %s1205 = scalar_lea.vmem %s16, %s1204
      // Predicated region
      $region81: #{scvae_batch_forward.2} parent=79 // pred_check
        %p1206 = pneg %p376
      $region82: #{scvae_batch_forward.2} parent=79 // pred_check_branch
        %1208 = sbr.rel (%p1206) target = $region84
      $region83: #{scvae_batch_forward.2} parent=79 // pred_region
        _
      $region84: #{scvae_batch_forward.2} parent=79 // pred_fallthru
        _
      // Predicated region
      $region85: #{scvae_batch_forward.2} parent=79 // pred_check
        %p1209 = pneg %p402
      $region86: #{scvae_batch_forward.2} parent=79 // pred_check_branch
        %1211 = sbr.rel (%p1209) target = $region88
      $region87: #{scvae_batch_forward.2} parent=79 // pred_region
        _
      $region88: #{scvae_batch_forward.2} parent=79 // pred_fallthru
        _
    $region80: #{scvae_batch_forward.2} parent=5 // pred_fallthru
      _
    %p1212 = scmp.le.s32.totalorder 2, %s23
    // Predicated region
    $region89: #{scvae_batch_forward.2} parent=5 // pred_check
      %p1213 = pneg %p1212
    $region90: #{scvae_batch_forward.2} parent=5 // pred_check_branch
      %1215 = sbr.rel (%p1213) target = $region92
    $region91: #{scvae_batch_forward.2} parent=5 // pred_region
      %s1216 = ssub.s32 %s23, 2
      // Predicated region
      $region93: #{scvae_batch_forward.2} parent=91 // pred_check
        %p1217 = pneg %p382
      $region94: #{scvae_batch_forward.2} parent=91 // pred_check_branch
        %1219 = sbr.rel (%p1217) target = $region96
      $region95: #{scvae_batch_forward.2} parent=91 // pred_region
        %p1220 = scmp.lt.s32.totalorder %s29, 1
        %s1221 = scalar_select %p1220, %s29, 1
        %s1222 = smul.addr %s1221, 8
        %s1223 = scalar_lea.vmem %s15, %s1222
      $region96: #{scvae_batch_forward.2} parent=91 // pred_fallthru
        _
      // Predicated region
      $region97: #{scvae_batch_forward.2} parent=91 // pred_check
        %p1224 = pneg %p408
      $region98: #{scvae_batch_forward.2} parent=91 // pred_check_branch
        %1226 = sbr.rel (%p1224) target = $region100
      $region99: #{scvae_batch_forward.2} parent=91 // pred_region
        %p1227 = scmp.lt.s32.totalorder %s29, 1
        %s1228 = scalar_select %p1227, %s29, 1
        %s1229 = smul.addr %s1228, 4
        %s1230 = scalar_lea.vmem %s16, %s1229
      $region100: #{scvae_batch_forward.2} parent=91 // pred_fallthru
        _
    $region92: #{scvae_batch_forward.2} parent=5 // pred_fallthru
      _
  $region6: #{scvae_batch_forward.2} parent=0 // loop_footer
    %s27 = sadd.s32 1, %s23
  $region7: #{scvae_batch_forward.2} parent=0 // loop_footer_branch
    %22 = sbr.rel target = $region3
  $region8: #{scvae_batch_forward.2} parent=0 // loop_exit
    _

</llo_original>
